<compile_context>
chip_gen: v5e
topology: v5e:2x2
jax: 0.10.0
libtpu: 0.0.40
codegen_flags: <defaults>
</compile_context>

<pallas_src>
import functools

import jax
import jax.numpy as jnp
from jax.experimental import pallas as pl
from jax.experimental.pallas import tpu as pltpu

LANE = 128


def _round_up(x, m):
    return (x + m - 1) // m * m


# ----------------------------------------------------------------------------- tiled path
def _gcn_layer_kernel(a_ref, m_ref, w_ref, b_ref, o_ref, acc_ref, *,
                      apply_relu, tk, resident_m):
    """One grid step of out = act((A @ M) @ W + b) for (row tile i, reduce tile k)."""
    k = pl.program_id(1)

    @pl.when(k == 0)
    def _():
        acc_ref[...] = jnp.zeros_like(acc_ref)

    if resident_m:
        off = pl.multiple_of(k * tk, tk)
        m_tile = m_ref[pl.ds(off, tk), :]      # resident M: read from HBM once, sliced in VMEM
    else:
        m_tile = m_ref[...]                    # streamed (tk, F) tile
    acc_ref[...] += jnp.dot(a_ref[...], m_tile, preferred_element_type=jnp.float32)

    @pl.when(k == pl.num_programs(1) - 1)
    def _():
        # bf16 x bf16 finalize projection (single-pass MXU on every generation);
        # bias add / relu stay in f32.
        out = jnp.dot(acc_ref[...].astype(jnp.bfloat16), w_ref[...],
                      preferred_element_type=jnp.float32) + b_ref[...]
        if apply_relu:
            out = jnp.maximum(out, 0.0)
        o_ref[...] = out.astype(o_ref.dtype)


def _gcn_layer(a, m, w, b, *, apply_relu, out_dtype, resident_m_cap_bytes):
    """Tiled act((a @ m) @ w + b) with a (N,N) bf16, m (N,F) bf16, w bf16, b f32. N%128==0."""
    n = a.shape[0]
    f_pad = m.shape[1]
    h_pad = w.shape[1]
    assert n % LANE == 0 and f_pad % LANE == 0 and h_pad % LANE == 0

    # Large tiles amortize per-grid-step overhead on the HBM-bound A stream; keep >= 2 row
    # tiles so the "parallel" axis can split across TensorCores.
    tm = next(c for c in (512, 256, 128) if n % c == 0)
    while tm > 128 and n // tm < 2:
        tm //= 2
    tk = next(c for c in (1024, 512, 256, 128) if n % c == 0)

    resident_m = n * f_pad * 2 <= resident_m_cap_bytes
    out_itemsize = jnp.dtype(out_dtype).itemsize

    def vmem_est(tm_, tk_):
        m_blk = (n if resident_m else tk_) * f_pad * 2
        return (2 * tm_ * tk_ * 2 + 2 * m_blk + 2 * f_pad * h_pad * 2 + 2 * h_pad * 4
                + 2 * tm_ * h_pad * out_itemsize + tm_ * f_pad * 4)

    # Keep the VMEM plan under ~44 MiB so it also fits v7x (64 MiB physical VMEM).
    while vmem_est(tm, tk) > (44 << 20) and tk > 128:
        tk //= 2
    while vmem_est(tm, tk) > (44 << 20) and tm > 128:
        tm //= 2
    vmem_limit = int(min(max(vmem_est(tm, tk) + (4 << 20), 32 << 20), 48 << 20))

    if resident_m:
        m_spec = pl.BlockSpec((n, f_pad), lambda i, k: (0, 0))       # one HBM read total
        m_hbm_bytes = n * f_pad * 2
    else:
        m_spec = pl.BlockSpec((tk, f_pad), lambda i, k: (k, 0))      # re-read per row tile
        m_hbm_bytes = (n // tm) * n * f_pad * 2

    kernel = functools.partial(_gcn_layer_kernel, apply_relu=apply_relu,
                               tk=tk, resident_m=resident_m)
    flops = 2 * n * n * f_pad + 2 * n * f_pad * h_pad
    bytes_accessed = (n * n * 2 + m_hbm_bytes + f_pad * h_pad * 2 + h_pad * 4
                      + n * h_pad * out_itemsize)

    # NOTE: if DMA is still exposed after the larger tiles, add
    # pipeline_mode=pl.Buffered(3) on the A_hat BlockSpec below.
    return pl.pallas_call(
        kernel,
        out_shape=jax.ShapeDtypeStruct((n, h_pad), out_dtype),
        grid_spec=pltpu.PrefetchScalarGridSpec(
            num_scalar_prefetch=0,
            grid=(n // tm, n // tk),                                 # reduce axis last
            in_specs=[
                pl.BlockSpec((tm, tk), lambda i, k: (i, k)),         # A_hat tile (streamed)
                m_spec,                                              # node features
                pl.BlockSpec((f_pad, h_pad), lambda i, k: (0, 0)),   # dense W (resident)
                pl.BlockSpec((1, h_pad), lambda i, k: (0, 0)),       # bias (resident)
            ],
            out_specs=pl.BlockSpec((tm, h_pad), lambda i, k: (i, 0)),
            scratch_shapes=[pltpu.VMEM((tm, f_pad), jnp.float32)],   # A@M accumulator
        ),
        compiler_params=pltpu.CompilerParams(
            dimension_semantics=("parallel", "arbitrary"),
            vmem_limit_bytes=vmem_limit,
        ),
        cost_estimate=pl.CostEstimate(flops=flops, transcendentals=0,
                                      bytes_accessed=bytes_accessed),
    )(a, m, w, b)


# ----------------------------------------------------------------------------- fused path
def _fused_gcn_kernel(a_ref, x_ref, w1_ref, b1_ref, w2_ref, b2_ref, o_ref, h_ref):
    """Both GCN layers in one kernel for small graphs; H never leaves VMEM."""
    ax = jnp.dot(a_ref[...], x_ref[...], preferred_element_type=jnp.float32)
    h = jnp.dot(ax.astype(jnp.bfloat16), w1_ref[...],
                preferred_element_type=jnp.float32) + b1_ref[...]
    h_ref[...] = jnp.maximum(h, 0.0).astype(jnp.bfloat16)
    ah = jnp.dot(a_ref[...], h_ref[...], preferred_element_type=jnp.float32)
    out = jnp.dot(ah.astype(jnp.bfloat16), w2_ref[...],
                  preferred_element_type=jnp.float32) + b2_ref[...]
    o_ref[...] = out.astype(o_ref.dtype)


def _fused_gcn(a, x, w1, b1, w2, b2, *, vmem_est):
    n, f_pad = x.shape
    hid_p = w1.shape[1]
    out_p = w2.shape[1]
    flops = (2 * n * n * f_pad + 2 * n * f_pad * hid_p
             + 2 * n * n * hid_p + 2 * n * hid_p * out_p)
    bytes_accessed = (n * n * 2 + n * f_pad * 2 + f_pad * hid_p * 2 + hid_p * 4
                      + hid_p * out_p * 2 + out_p * 4 + n * out_p * 4)
    vmem_limit = int(min(max(vmem_est + (4 << 20), 32 << 20), 48 << 20))
    return pl.pallas_call(
        _fused_gcn_kernel,
        out_shape=jax.ShapeDtypeStruct((n, out_p), jnp.float32),
        grid_spec=pltpu.PrefetchScalarGridSpec(
            num_scalar_prefetch=0,
            grid=(1,),
            in_specs=[
                pl.BlockSpec((n, n), lambda i: (0, 0)),
                pl.BlockSpec((n, f_pad), lambda i: (0, 0)),
                pl.BlockSpec((f_pad, hid_p), lambda i: (0, 0)),
                pl.BlockSpec((1, hid_p), lambda i: (0, 0)),
                pl.BlockSpec((hid_p, out_p), lambda i: (0, 0)),
                pl.BlockSpec((1, out_p), lambda i: (0, 0)),
            ],
            out_specs=pl.BlockSpec((n, out_p), lambda i: (0, 0)),
            scratch_shapes=[pltpu.VMEM((n, hid_p), jnp.bfloat16)],   # hidden activations H
        ),
        compiler_params=pltpu.CompilerParams(
            dimension_semantics=("arbitrary",),
            vmem_limit_bytes=vmem_limit,
        ),
        cost_estimate=pl.CostEstimate(flops=flops, transcendentals=0,
                                      bytes_accessed=bytes_accessed),
    )(a, x, w1, b1, w2, b2)


# ----------------------------------------------------------------------------- wrapper
def gcn_encoder(a_hat, x, w1, b1, w2, b2, *, force_tiled=False,
                resident_m_cap_bytes=8 << 20):
    """relu(A_hat @ X @ W1 + b1) -> A_hat @ (.) @ W2 + b2 (PyG GCNConv defaults)."""
    n, fin = x.shape
    hid = w1.shape[1]
    out_c = w2.shape[1]

    n_pad = _round_up(n, LANE)          # zero rows/cols of A_hat / X are exact padding
    fin_p = _round_up(fin, LANE)
    hid_p = _round_up(hid, LANE)
    out_p = _round_up(out_c, LANE)

    # bf16 streaming of A_hat and activations halves HBM traffic on the bandwidth-bound
    # A@M products; weights bf16 for single-pass MXU finalize; biases stay f32.
    a_p = jnp.pad(a_hat, ((0, n_pad - n), (0, n_pad - n))).astype(jnp.bfloat16)
    x_p = jnp.pad(x, ((0, n_pad - n), (0, fin_p - fin))).astype(jnp.bfloat16)
    w1_p = jnp.pad(w1, ((0, fin_p - fin), (0, hid_p - hid))).astype(jnp.bfloat16)
    b1_p = jnp.pad(b1.reshape(1, -1), ((0, 0), (0, hid_p - hid))).astype(jnp.float32)
    w2_p = jnp.pad(w2, ((0, hid_p - hid), (0, out_p - out_c))).astype(jnp.bfloat16)
    b2_p = jnp.pad(b2.reshape(1, -1), ((0, 0), (0, out_p - out_c))).astype(jnp.float32)

    # Fused single-call path for small graphs where everything fits comfortably in VMEM.
    fused_est = (2 * n_pad * n_pad * 2 + 2 * n_pad * fin_p * 2 + n_pad * hid_p * 2
                 + 2 * n_pad * out_p * 4 + n_pad * max(fin_p, hid_p) * 4
                 + 2 * (fin_p * hid_p + hid_p * out_p) * 2 + 2 * (hid_p + out_p) * 4)
    if (not force_tiled) and n_pad <= 1024 and fused_est <= (10 << 20):
        out = _fused_gcn(a_p, x_p, w1_p, b1_p, w2_p, b2_p, vmem_est=fused_est)
    else:
        h = _gcn_layer(a_p, x_p, w1_p, b1_p, apply_relu=True, out_dtype=jnp.bfloat16,
                       resident_m_cap_bytes=resident_m_cap_bytes)
        out = _gcn_layer(a_p, h, w2_p, b2_p, apply_relu=False, out_dtype=jnp.float32,
                         resident_m_cap_bytes=resident_m_cap_bytes)
    return out[:n, :out_c]


def build_normalized_adjacency(edge_index, num_nodes):
    """Dense A_hat = D^-1/2 (A + I) D^-1/2, matching PyG gcn_norm (plain JAX glue).

    # TODO(synk): for realistic graphs (E << N^2) replace this densification with a
    # sparse gather/scatter kernel via PrefetchScalarGridSpec (row pointers in SMEM).
    """
    src = edge_index[0]
    dst = edge_index[1]
    loop = jnp.arange(num_nodes, dtype=edge_index.dtype)
    src = jnp.concatenate([src, loop])
    dst = jnp.concatenate([dst, loop])
    w = jnp.ones(src.shape[0], dtype=jnp.float32)
    deg = jnp.zeros((num_nodes,), jnp.float32).at[dst].add(w)
    deg_inv_sqrt = jnp.where(deg > 0, 1.0 / jnp.sqrt(deg), 0.0)
    norm = deg_inv_sqrt[src] * w * deg_inv_sqrt[dst]
    # out[target] += norm * msg[source]  ->  A_hat[target, source]
    return jnp.zeros((num_nodes, num_nodes), jnp.float32).at[dst, src].add(norm)


def reference_forward(a_hat, x, w1, b1, w2, b2):
    """Pure-JAX reference mirroring the kernel's bf16 precision chain."""
    hp = jax.lax.Precision.HIGHEST
    rt = lambda t: t.astype(jnp.bfloat16).astype(jnp.float32)   # bf16 round trip
    a, xb, w1b, w2b = rt(a_hat), rt(x), rt(w1), rt(w2)
    ax = jnp.dot(a, xb, precision=hp)
    h = jnp.maximum(jnp.dot(rt(ax), w1b, precision=hp) + b1.reshape(1, -1), 0.0)
    ah = jnp.dot(a, rt(h), precision=hp)
    return jnp.dot(rt(ah), w2b, precision=hp) + b2.reshape(1, -1)


if __name__ == "__main__":
    key = jax.random.PRNGKey(0)
    k_w1, k_b1, k_w2, k_b2 = jax.random.split(key, 4)

    # Small, module-consistent shapes (GCNEncoder: hidden = 2 * out_channels).
    in_channels = 16
    out_channels = 8
    hidden = 2 * out_channels
    num_edges = 1024

    lim1 = (6.0 / (in_channels + hidden)) ** 0.5
    lim2 = (6.0 / (hidden + out_channels)) ** 0.5
    w1 = jax.random.uniform(k_w1, (in_channels, hidden), jnp.float32, -lim1, lim1)
    b1 = 0.1 * jax.random.normal(k_b1, (1, hidden), jnp.float32)
    w2 = jax.random.uniform(k_w2, (hidden, out_channels), jnp.float32, -lim2, lim2)
    b2 = 0.1 * jax.random.normal(k_b2, (1, out_channels), jnp.float32)

    # Exercise every path: fused, tiled resident-M, tiled streamed-M, and N-padding.
    configs = [
        (256, False, 8 << 20),   # fused single-call path
        (256, True, 8 << 20),    # tiled path, VMEM-resident feature matrix
        (200, True, 0),          # tiled path, streamed M + N padded to 256
        (200, False, 8 << 20),   # fused path with N padding
    ]
    for num_nodes, force_tiled, m_cap in configs:
        k_x, k_e = jax.random.split(jax.random.fold_in(key, num_nodes))
        x = jax.random.normal(k_x, (num_nodes, in_channels), dtype=jnp.float32)
        edge_index = jax.random.randint(k_e, (2, num_edges), 0, num_nodes, dtype=jnp.int32)
        a_hat = build_normalized_adjacency(edge_index, num_nodes)

        fn = jax.jit(functools.partial(gcn_encoder, force_tiled=force_tiled,
                                       resident_m_cap_bytes=m_cap))
        out = jax.block_until_ready(fn(a_hat, x, w1, b1, w2, b2))
        ref = reference_forward(a_hat, x, w1, b1, w2, b2)

        assert out.shape == (num_nodes, out_channels), out.shape
        # Tolerance covers bf16 rounding-boundary / summation-order divergence between the
        # MXU pipeline and the f32 reference that mirrors the same precision chain.
        max_err = float(jnp.max(jnp.abs(out - ref)))
        assert jnp.allclose(out, ref, atol=2e-2, rtol=2e-2), (num_nodes, force_tiled, max_err)

    print("KERNEL_OK")
</pallas_src>

<mosaic_0001>
module attributes {stable_mosaic.version = 11 : i64} {
  func.func @_fused_gcn_kernel(%arg0: i32, %arg1: memref<256x256xbf16, #tpu.memory_space<vmem>>, %arg2: memref<256x128xbf16, #tpu.memory_space<vmem>>, %arg3: memref<128x128xbf16, #tpu.memory_space<vmem>>, %arg4: memref<1x128xf32, #tpu.memory_space<vmem>>, %arg5: memref<128x128xbf16, #tpu.memory_space<vmem>>, %arg6: memref<1x128xf32, #tpu.memory_space<vmem>>, %arg7: memref<256x128xf32, #tpu.memory_space<vmem>>, %arg8: memref<256x128xbf16, #tpu.memory_space<vmem>>) attributes {dimension_semantics = [#tpu.dimension_semantics<arbitrary>], iteration_bounds = array<i64: 1>, scalar_prefetch = 0 : i64, scratch_operands = 1 : i64, tpu.core_type = #tpu.core_type<tc>, window_params = [{pipeline_mode = #tpu.pipeline_mode<synchronous>, transform_indices = @transform_0, window_bounds = array<i64: 256, 256>}, {pipeline_mode = #tpu.pipeline_mode<synchronous>, transform_indices = @transform_1, window_bounds = array<i64: 256, 128>}, {pipeline_mode = #tpu.pipeline_mode<synchronous>, transform_indices = @transform_2, window_bounds = array<i64: 128, 128>}, {pipeline_mode = #tpu.pipeline_mode<synchronous>, transform_indices = @transform_3, window_bounds = array<i64: 1, 128>}, {pipeline_mode = #tpu.pipeline_mode<synchronous>, transform_indices = @transform_4, window_bounds = array<i64: 128, 128>}, {pipeline_mode = #tpu.pipeline_mode<synchronous>, transform_indices = @transform_5, window_bounds = array<i64: 1, 128>}, {pipeline_mode = #tpu.pipeline_mode<synchronous>, transform_indices = @transform_6, window_bounds = array<i64: 256, 128>}]} {
    %c0 = arith.constant 0 : index
    %c0_0 = arith.constant 0 : index
    %0 = vector.load %arg1[%c0, %c0_0] : memref<256x256xbf16, #tpu.memory_space<vmem>>, vector<256x256xbf16>
    %c0_1 = arith.constant 0 : index
    %c0_2 = arith.constant 0 : index
    %1 = vector.load %arg2[%c0_1, %c0_2] : memref<256x128xbf16, #tpu.memory_space<vmem>>, vector<256x128xbf16>
    %cst = arith.constant dense<0.000000e+00> : vector<256x128xf32>
    %2 = tpu.matmul %0, %1, %cst {dimension_numbers = #tpu.dot_dimension_numbers<[1], [0], [0], [1], [0, 0, 1, 1], [], []>} : vector<256x256xbf16>, vector<256x128xbf16>, vector<256x128xf32> -> vector<256x128xf32>
    %3 = arith.truncf %2 : vector<256x128xf32> to vector<256x128xbf16>
    %c0_3 = arith.constant 0 : index
    %c0_4 = arith.constant 0 : index
    %4 = vector.load %arg3[%c0_3, %c0_4] : memref<128x128xbf16, #tpu.memory_space<vmem>>, vector<128x128xbf16>
    %cst_5 = arith.constant dense<0.000000e+00> : vector<256x128xf32>
    %5 = tpu.matmul %3, %4, %cst_5 {dimension_numbers = #tpu.dot_dimension_numbers<[1], [0], [0], [1], [0, 0, 1, 1], [], []>} : vector<256x128xbf16>, vector<128x128xbf16>, vector<256x128xf32> -> vector<256x128xf32>
    %c0_6 = arith.constant 0 : index
    %c0_7 = arith.constant 0 : index
    %6 = vector.load %arg4[%c0_6, %c0_7] : memref<1x128xf32, #tpu.memory_space<vmem>>, vector<1x128xf32>
    %7 = vector.broadcast %6 : vector<1x128xf32> to vector<256x128xf32>
    %8 = arith.addf %5, %7 : vector<256x128xf32>
    %cst_8 = arith.constant 0.000000e+00 : f32
    %9 = vector.broadcast %cst_8 : f32 to vector<256x128xf32>
    %10 = arith.maximumf %8, %9 : vector<256x128xf32>
    %11 = arith.truncf %10 : vector<256x128xf32> to vector<256x128xbf16>
    %c0_9 = arith.constant 0 : index
    %c0_10 = arith.constant 0 : index
    %12 = vector.load %arg8[%c0_9, %c0_10] : memref<256x128xbf16, #tpu.memory_space<vmem>>, vector<256x128xbf16>
    tpu.vector_store %arg8[%c0_9, %c0_10], %11 {strides = array<i32>} : memref<256x128xbf16, #tpu.memory_space<vmem>>, vector<256x128xbf16>,
    %c0_11 = arith.constant 0 : index
    %c0_12 = arith.constant 0 : index
    %13 = vector.load %arg1[%c0_11, %c0_12] : memref<256x256xbf16, #tpu.memory_space<vmem>>, vector<256x256xbf16>
    %c0_13 = arith.constant 0 : index
    %c0_14 = arith.constant 0 : index
    %14 = vector.load %arg8[%c0_13, %c0_14] : memref<256x128xbf16, #tpu.memory_space<vmem>>, vector<256x128xbf16>
    %cst_15 = arith.constant dense<0.000000e+00> : vector<256x128xf32>
    %15 = tpu.matmul %13, %14, %cst_15 {dimension_numbers = #tpu.dot_dimension_numbers<[1], [0], [0], [1], [0, 0, 1, 1], [], []>} : vector<256x256xbf16>, vector<256x128xbf16>, vector<256x128xf32> -> vector<256x128xf32>
    %16 = arith.truncf %15 : vector<256x128xf32> to vector<256x128xbf16>
    %c0_16 = arith.constant 0 : index
    %c0_17 = arith.constant 0 : index
    %17 = vector.load %arg5[%c0_16, %c0_17] : memref<128x128xbf16, #tpu.memory_space<vmem>>, vector<128x128xbf16>
    %cst_18 = arith.constant dense<0.000000e+00> : vector<256x128xf32>
    %18 = tpu.matmul %16, %17, %cst_18 {dimension_numbers = #tpu.dot_dimension_numbers<[1], [0], [0], [1], [0, 0, 1, 1], [], []>} : vector<256x128xbf16>, vector<128x128xbf16>, vector<256x128xf32> -> vector<256x128xf32>
    %c0_19 = arith.constant 0 : index
    %c0_20 = arith.constant 0 : index
    %19 = vector.load %arg6[%c0_19, %c0_20] : memref<1x128xf32, #tpu.memory_space<vmem>>, vector<1x128xf32>
    %20 = vector.broadcast %19 : vector<1x128xf32> to vector<256x128xf32>
    %21 = arith.addf %18, %20 : vector<256x128xf32>
    %c0_21 = arith.constant 0 : index
    %c0_22 = arith.constant 0 : index
    %22 = vector.load %arg7[%c0_21, %c0_22] : memref<256x128xf32, #tpu.memory_space<vmem>>, vector<256x128xf32>
    tpu.vector_store %arg7[%c0_21, %c0_22], %21 {strides = array<i32>} : memref<256x128xf32, #tpu.memory_space<vmem>>, vector<256x128xf32>,
    return
  }
  func.func @transform_0(%arg0: i32) -> (i32, i32) {
    %c0_i32 = arith.constant 0 : i32
    %c0_i32_0 = arith.constant 0 : i32
    %c0_i32_1 = arith.constant 0 : i32
    return %c0_i32, %c0_i32_0 : i32, i32
  }
  func.func @transform_1(%arg0: i32) -> (i32, i32) {
    %c0_i32 = arith.constant 0 : i32
    %c0_i32_0 = arith.constant 0 : i32
    %c0_i32_1 = arith.constant 0 : i32
    return %c0_i32, %c0_i32_0 : i32, i32
  }
  func.func @transform_2(%arg0: i32) -> (i32, i32) {
    %c0_i32 = arith.constant 0 : i32
    %c0_i32_0 = arith.constant 0 : i32
    %c0_i32_1 = arith.constant 0 : i32
    return %c0_i32, %c0_i32_0 : i32, i32
  }
  func.func @transform_3(%arg0: i32) -> (i32, i32) {
    %c0_i32 = arith.constant 0 : i32
    %c0_i32_0 = arith.constant 0 : i32
    %c0_i32_1 = arith.constant 0 : i32
    return %c0_i32, %c0_i32_0 : i32, i32
  }
  func.func @transform_4(%arg0: i32) -> (i32, i32) {
    %c0_i32 = arith.constant 0 : i32
    %c0_i32_0 = arith.constant 0 : i32
    %c0_i32_1 = arith.constant 0 : i32
    return %c0_i32, %c0_i32_0 : i32, i32
  }
  func.func @transform_5(%arg0: i32) -> (i32, i32) {
    %c0_i32 = arith.constant 0 : i32
    %c0_i32_0 = arith.constant 0 : i32
    %c0_i32_1 = arith.constant 0 : i32
    return %c0_i32, %c0_i32_0 : i32, i32
  }
  func.func @transform_6(%arg0: i32) -> (i32, i32) {
    %c0_i32 = arith.constant 0 : i32
    %c0_i32_0 = arith.constant 0 : i32
    %c0_i32_1 = arith.constant 0 : i32
    return %c0_i32, %c0_i32_0 : i32, i32
  }
}

</mosaic_0001>

<llo_original>
// kernel: gcn_encoder.1
$region0: #{gcn_encoder.1}
  #allocation0 [shape = 'u32[]', space=smem, size = 0x4, offset = 0x4, fixed_abs, tag = 'smem constant byte address 0x4 - core index']
  #allocation1 [shape = 'u32[72,128]{1,0:T(1,128)}', space=vmem, size = 0x9000, scoped, tag = 'internal scratch']
  #allocation2 [shape = 'bf16[256,128]{1,0:T(8,128)(2,1)}', space=vmem, size = 0x10000, scoped, tag = 'scratch operand']
  %s0 = inlined_call_operand.vmem [shape: bf16[256,256], index: 0, kind: input, shape index: {}]
  %s1 = inlined_call_operand.vmem [shape: bf16[256,128], index: 1, kind: input, shape index: {}]
  %s2 = inlined_call_operand.vmem [shape: bf16[128,128], index: 2, kind: input, shape index: {}]
  %s3 = inlined_call_operand.vmem [shape: f32[1,128], index: 3, kind: input, shape index: {}]
  %s4 = inlined_call_operand.vmem [shape: bf16[128,128], index: 4, kind: input, shape index: {}]
  %s5 = inlined_call_operand.vmem [shape: f32[1,128], index: 5, kind: input, shape index: {}]
  %s6 = inlined_call_operand.vmem [shape: f32[256,128], index: 6, kind: output, shape index: {}]
  %s7 = sld [smem:[#allocation0]]
  $region34: #{gcn_encoder.1} parent=0
    _
  %s9 = ssub.s32 1, %s7
  %s10 = scalar_select 0, %s9, %s7
  // Predicated region
  $region2: #{gcn_encoder.1} parent=0 // pred_check
    _
  $region3: #{gcn_encoder.1} parent=0 // pred_check_branch
    %12 = sbr.rel (0) target = $region5
  $region4: #{gcn_encoder.1} parent=0 // pred_region
    _
  $region5: #{gcn_encoder.1} parent=0 // pred_fallthru
    _
  // Predicated region
  $region6: #{gcn_encoder.1} parent=0 // pred_check
    _
  $region7: #{gcn_encoder.1} parent=0 // pred_check_branch
    %14 = sbr.rel (0) target = $region9
  $region8: #{gcn_encoder.1} parent=0 // pred_region
    _
  $region9: #{gcn_encoder.1} parent=0 // pred_fallthru
    _
  // Predicated region
  $region10: #{gcn_encoder.1} parent=0 // pred_check
    _
  $region11: #{gcn_encoder.1} parent=0 // pred_check_branch
    %16 = sbr.rel (0) target = $region13
  $region12: #{gcn_encoder.1} parent=0 // pred_region
    _
  $region13: #{gcn_encoder.1} parent=0 // pred_fallthru
    _
  // Predicated region
  $region14: #{gcn_encoder.1} parent=0 // pred_check
    _
  $region15: #{gcn_encoder.1} parent=0 // pred_check_branch
    %18 = sbr.rel (0) target = $region17
  $region16: #{gcn_encoder.1} parent=0 // pred_region
    _
  $region17: #{gcn_encoder.1} parent=0 // pred_fallthru
    _
  // Predicated region
  $region18: #{gcn_encoder.1} parent=0 // pred_check
    _
  $region19: #{gcn_encoder.1} parent=0 // pred_check_branch
    %20 = sbr.rel (0) target = $region21
  $region20: #{gcn_encoder.1} parent=0 // pred_region
    _
  $region21: #{gcn_encoder.1} parent=0 // pred_fallthru
    _
  // Predicated region
  $region22: #{gcn_encoder.1} parent=0 // pred_check
    _
  $region23: #{gcn_encoder.1} parent=0 // pred_check_branch
    %22 = sbr.rel (0) target = $region25
  $region24: #{gcn_encoder.1} parent=0 // pred_region
    _
  $region25: #{gcn_encoder.1} parent=0 // pred_fallthru
    _
  %v23 = vld [vmem:[%s0] sm:$0xff]
  %v24 = vld [vmem:[%s0 + $0x8] sm:$0xff]
  %v25 = vld [vmem:[%s0 + $0x10] sm:$0xff]
  %v26 = vld [vmem:[%s0 + $0x18] sm:$0xff]
  %v27 = vld [vmem:[%s0 + $0x20] sm:$0xff]
  %v28 = vld [vmem:[%s0 + $0x28] sm:$0xff]
  %v29 = vld [vmem:[%s0 + $0x30] sm:$0xff]
  %v30 = vld [vmem:[%s0 + $0x38] sm:$0xff]
  %v31 = vld [vmem:[%s0 + $0x40] sm:$0xff]
  %v32 = vld [vmem:[%s0 + $0x48] sm:$0xff]
  %v33 = vld [vmem:[%s0 + $0x50] sm:$0xff]
  %v34 = vld [vmem:[%s0 + $0x58] sm:$0xff]
  %v35 = vld [vmem:[%s0 + $0x60] sm:$0xff]
  %v36 = vld [vmem:[%s0 + $0x68] sm:$0xff]
  %v37 = vld [vmem:[%s0 + $0x70] sm:$0xff]
  %v38 = vld [vmem:[%s0 + $0x78] sm:$0xff]
  %v39 = vld [vmem:[%s0 + $0x80] sm:$0xff]
  %v40 = vld [vmem:[%s0 + $0x88] sm:$0xff]
  %v41 = vld [vmem:[%s0 + $0x90] sm:$0xff]
  %v42 = vld [vmem:[%s0 + $0x98] sm:$0xff]
  %v43 = vld [vmem:[%s0 + $0xa0] sm:$0xff]
  %v44 = vld [vmem:[%s0 + $0xa8] sm:$0xff]
  %v45 = vld [vmem:[%s0 + $0xb0] sm:$0xff]
  %v46 = vld [vmem:[%s0 + $0xb8] sm:$0xff]
  %v47 = vld [vmem:[%s0 + $0xc0] sm:$0xff]
  %v48 = vld [vmem:[%s0 + $0xc8] sm:$0xff]
  %v49 = vld [vmem:[%s0 + $0xd0] sm:$0xff]
  %v50 = vld [vmem:[%s0 + $0xd8] sm:$0xff]
  %v51 = vld [vmem:[%s0 + $0xe0] sm:$0xff]
  %v52 = vld [vmem:[%s0 + $0xe8] sm:$0xff]
  %v53 = vld [vmem:[%s0 + $0xf0] sm:$0xff]
  %v54 = vld [vmem:[%s0 + $0xf8] sm:$0xff]
  %v55 = vld [vmem:[%s1] sm:$0xf]
  %v56 = vld [vmem:[%s1 + $0x4] sm:$0xf]
  %v57 = vld [vmem:[%s1 + $0x8] sm:$0xf]
  %v58 = vld [vmem:[%s1 + $0xc] sm:$0xf]
  %v59 = vld [vmem:[%s1 + $0x10] sm:$0xf]
  %v60 = vld [vmem:[%s1 + $0x14] sm:$0xf]
  %v61 = vld [vmem:[%s1 + $0x18] sm:$0xf]
  %v62 = vld [vmem:[%s1 + $0x1c] sm:$0xf]
  %v63 = vld [vmem:[%s1 + $0x20] sm:$0xf]
  %v64 = vld [vmem:[%s1 + $0x24] sm:$0xf]
  %v65 = vld [vmem:[%s1 + $0x28] sm:$0xf]
  %v66 = vld [vmem:[%s1 + $0x2c] sm:$0xf]
  %v67 = vld [vmem:[%s1 + $0x30] sm:$0xf]
  %v68 = vld [vmem:[%s1 + $0x34] sm:$0xf]
  %v69 = vld [vmem:[%s1 + $0x38] sm:$0xf]
  %v70 = vld [vmem:[%s1 + $0x3c] sm:$0xf]
  %v71 = vld [vmem:[%s1 + $0x40] sm:$0xf]
  %v72 = vld [vmem:[%s1 + $0x44] sm:$0xf]
  %v73 = vld [vmem:[%s1 + $0x48] sm:$0xf]
  %v74 = vld [vmem:[%s1 + $0x4c] sm:$0xf]
  %v75 = vld [vmem:[%s1 + $0x50] sm:$0xf]
  %v76 = vld [vmem:[%s1 + $0x54] sm:$0xf]
  %v77 = vld [vmem:[%s1 + $0x58] sm:$0xf]
  %v78 = vld [vmem:[%s1 + $0x5c] sm:$0xf]
  %v79 = vld [vmem:[%s1 + $0x60] sm:$0xf]
  %v80 = vld [vmem:[%s1 + $0x64] sm:$0xf]
  %v81 = vld [vmem:[%s1 + $0x68] sm:$0xf]
  %v82 = vld [vmem:[%s1 + $0x6c] sm:$0xf]
  %v83 = vld [vmem:[%s1 + $0x70] sm:$0xf]
  %v84 = vld [vmem:[%s1 + $0x74] sm:$0xf]
  %v85 = vld [vmem:[%s1 + $0x78] sm:$0xf]
  %v86 = vld [vmem:[%s1 + $0x7c] sm:$0xf]
  %v119 = vunpack.c.l.b16 %v23
  %v120 = vunpack.c.h.b16 %v23
  %v121 = vunpack.c.l.b16 %v24
  %v122 = vunpack.c.h.b16 %v24
  %v123 = vunpack.c.l.b16 %v25
  %v124 = vunpack.c.h.b16 %v25
  %v125 = vunpack.c.l.b16 %v26
  %v126 = vunpack.c.h.b16 %v26
  %v127 = vunpack.c.l.b16 %v27
  %v128 = vunpack.c.h.b16 %v27
  %v129 = vunpack.c.l.b16 %v28
  %v130 = vunpack.c.h.b16 %v28
  %v131 = vunpack.c.l.b16 %v29
  %v132 = vunpack.c.h.b16 %v29
  %v133 = vunpack.c.l.b16 %v30
  %v134 = vunpack.c.h.b16 %v30
  %v135 = vunpack.c.l.b16 %v31
  %v136 = vunpack.c.h.b16 %v31
  %v137 = vunpack.c.l.b16 %v32
  %v138 = vunpack.c.h.b16 %v32
  %v139 = vunpack.c.l.b16 %v33
  %v140 = vunpack.c.h.b16 %v33
  %v141 = vunpack.c.l.b16 %v34
  %v142 = vunpack.c.h.b16 %v34
  %v143 = vunpack.c.l.b16 %v35
  %v144 = vunpack.c.h.b16 %v35
  %v145 = vunpack.c.l.b16 %v36
  %v146 = vunpack.c.h.b16 %v36
  %v147 = vunpack.c.l.b16 %v37
  %v148 = vunpack.c.h.b16 %v37
  %v149 = vunpack.c.l.b16 %v38
  %v150 = vunpack.c.h.b16 %v38
  %v151 = vunpack.c.l.b16 %v39
  %v152 = vunpack.c.h.b16 %v39
  %v153 = vunpack.c.l.b16 %v40
  %v154 = vunpack.c.h.b16 %v40
  %v155 = vunpack.c.l.b16 %v41
  %v156 = vunpack.c.h.b16 %v41
  %v157 = vunpack.c.l.b16 %v42
  %v158 = vunpack.c.h.b16 %v42
  %v159 = vunpack.c.l.b16 %v43
  %v160 = vunpack.c.h.b16 %v43
  %v161 = vunpack.c.l.b16 %v44
  %v162 = vunpack.c.h.b16 %v44
  %v163 = vunpack.c.l.b16 %v45
  %v164 = vunpack.c.h.b16 %v45
  %v165 = vunpack.c.l.b16 %v46
  %v166 = vunpack.c.h.b16 %v46
  %v167 = vunpack.c.l.b16 %v47
  %v168 = vunpack.c.h.b16 %v47
  %v169 = vunpack.c.l.b16 %v48
  %v170 = vunpack.c.h.b16 %v48
  %v171 = vunpack.c.l.b16 %v49
  %v172 = vunpack.c.h.b16 %v49
  %v173 = vunpack.c.l.b16 %v50
  %v174 = vunpack.c.h.b16 %v50
  %v175 = vunpack.c.l.b16 %v51
  %v176 = vunpack.c.h.b16 %v51
  %v177 = vunpack.c.l.b16 %v52
  %v178 = vunpack.c.h.b16 %v52
  %v179 = vunpack.c.l.b16 %v53
  %v180 = vunpack.c.h.b16 %v53
  %v181 = vunpack.c.l.b16 %v54
  %v182 = vunpack.c.h.b16 %v54
  %v183 = vpack.c.b16 %v121, %v119
  %v184 = vpack.c.b16 %v122, %v120
  %v185 = vpack.c.b16 %v125, %v123
  %v186 = vpack.c.b16 %v126, %v124
  %v187 = vpack.c.b16 %v129, %v127
  %v188 = vpack.c.b16 %v130, %v128
  %v189 = vpack.c.b16 %v133, %v131
  %v190 = vpack.c.b16 %v134, %v132
  %v191 = vpack.c.b16 %v137, %v135
  %v192 = vpack.c.b16 %v138, %v136
  %v193 = vpack.c.b16 %v141, %v139
  %v194 = vpack.c.b16 %v142, %v140
  %v195 = vpack.c.b16 %v145, %v143
  %v196 = vpack.c.b16 %v146, %v144
  %v197 = vpack.c.b16 %v149, %v147
  %v198 = vpack.c.b16 %v150, %v148
  %v199 = vpack.c.b16 %v153, %v151
  %v200 = vpack.c.b16 %v154, %v152
  %v201 = vpack.c.b16 %v157, %v155
  %v202 = vpack.c.b16 %v158, %v156
  %v203 = vpack.c.b16 %v161, %v159
  %v204 = vpack.c.b16 %v162, %v160
  %v205 = vpack.c.b16 %v165, %v163
  %v206 = vpack.c.b16 %v166, %v164
  %v207 = vpack.c.b16 %v169, %v167
  %v208 = vpack.c.b16 %v170, %v168
  %v209 = vpack.c.b16 %v173, %v171
  %v210 = vpack.c.b16 %v174, %v172
  %v211 = vpack.c.b16 %v177, %v175
  %v212 = vpack.c.b16 %v178, %v176
  %v213 = vpack.c.b16 %v181, %v179
  %v214 = vpack.c.b16 %v182, %v180
  %v279 = vunpack.c.l.b16 %v55
  %v280 = vunpack.c.l.b16 %v56
  %v281 = vunpack.c.l.b16 %v57
  %v282 = vunpack.c.l.b16 %v58
  %v283 = vunpack.c.l.b16 %v59
  %v284 = vunpack.c.l.b16 %v60
  %v285 = vunpack.c.l.b16 %v61
  %v286 = vunpack.c.l.b16 %v62
  %v287 = vunpack.c.l.b16 %v63
  %v288 = vunpack.c.l.b16 %v64
  %v289 = vunpack.c.l.b16 %v65
  %v290 = vunpack.c.l.b16 %v66
  %v291 = vunpack.c.l.b16 %v67
  %v292 = vunpack.c.l.b16 %v68
  %v293 = vunpack.c.l.b16 %v69
  %v294 = vunpack.c.l.b16 %v70
  %v295 = vunpack.c.l.b16 %v71
  %v296 = vunpack.c.l.b16 %v72
  %v297 = vunpack.c.l.b16 %v73
  %v298 = vunpack.c.l.b16 %v74
  %v299 = vunpack.c.l.b16 %v75
  %v300 = vunpack.c.l.b16 %v76
  %v301 = vunpack.c.l.b16 %v77
  %v302 = vunpack.c.l.b16 %v78
  %v303 = vunpack.c.l.b16 %v79
  %v304 = vunpack.c.l.b16 %v80
  %v305 = vunpack.c.l.b16 %v81
  %v306 = vunpack.c.l.b16 %v82
  %v307 = vunpack.c.l.b16 %v83
  %v308 = vunpack.c.l.b16 %v84
  %v309 = vunpack.c.l.b16 %v85
  %v310 = vunpack.c.l.b16 %v86
  %v311 = vpack.c.b16 %v280, %v279
  %v312 = vpack.c.b16 %v282, %v281
  %v313 = vpack.c.b16 %v284, %v283
  %v314 = vpack.c.b16 %v286, %v285
  %v315 = vpack.c.b16 %v288, %v287
  %v316 = vpack.c.b16 %v290, %v289
  %v317 = vpack.c.b16 %v292, %v291
  %v318 = vpack.c.b16 %v294, %v293
  %v319 = vpack.c.b16 %v296, %v295
  %v320 = vpack.c.b16 %v298, %v297
  %v321 = vpack.c.b16 %v300, %v299
  %v322 = vpack.c.b16 %v302, %v301
  %v323 = vpack.c.b16 %v304, %v303
  %v324 = vpack.c.b16 %v306, %v305
  %v325 = vpack.c.b16 %v308, %v307
  %v326 = vpack.c.b16 %v310, %v309
  %343 = vmatpush.bf16.msra.mxu0 %v318
  %344 = vmatpush.bf16.msra.mxu0 %v317
  %345 = vmatpush.bf16.msra.mxu0 %v316
  %346 = vmatpush.bf16.msra.mxu0 %v315
  %347 = vmatpush.bf16.msra.mxu0 %v314
  %348 = vmatpush.bf16.msra.mxu0 %v313
  %349 = vmatpush.bf16.msra.mxu0 %v312
  %350 = vmatpush.bf16.msra.mxu0 %v311
  %351 = vmatmul.bf16.gmra.mxu0 %v183
  %v352 = vpop.f32.mrf.mxu0
  %v353 = vadd.f32 0.0, %v352
  %v354 = vpop.f32.mrf.mxu0
  %v355 = vadd.f32 0.0, %v354
  %356 = vmatmul.bf16.gmra.mxu0 %v185
  %v357 = vpop.f32.mrf.mxu0
  %v358 = vadd.f32 0.0, %v357
  %v359 = vpop.f32.mrf.mxu0
  %v360 = vadd.f32 0.0, %v359
  %361 = vmatmul.bf16.gmra.mxu0 %v187
  %v362 = vpop.f32.mrf.mxu0
  %v363 = vadd.f32 0.0, %v362
  %v364 = vpop.f32.mrf.mxu0
  %v365 = vadd.f32 0.0, %v364
  %366 = vmatmul.bf16.gmra.mxu0 %v189
  %v367 = vpop.f32.mrf.mxu0
  %v368 = vadd.f32 0.0, %v367
  %v369 = vpop.f32.mrf.mxu0
  %v370 = vadd.f32 0.0, %v369
  %371 = vmatmul.bf16.gmra.mxu0 %v191
  %v372 = vpop.f32.mrf.mxu0
  %v373 = vadd.f32 0.0, %v372
  %v374 = vpop.f32.mrf.mxu0
  %v375 = vadd.f32 0.0, %v374
  %376 = vmatmul.bf16.gmra.mxu0 %v193
  %v377 = vpop.f32.mrf.mxu0
  %v378 = vadd.f32 0.0, %v377
  %v379 = vpop.f32.mrf.mxu0
  %v380 = vadd.f32 0.0, %v379
  %381 = vmatmul.bf16.gmra.mxu0 %v195
  %v382 = vpop.f32.mrf.mxu0
  %v383 = vadd.f32 0.0, %v382
  %v384 = vpop.f32.mrf.mxu0
  %v385 = vadd.f32 0.0, %v384
  %386 = vmatmul.bf16.gmra.mxu0 %v197
  %v387 = vpop.f32.mrf.mxu0
  %v388 = vadd.f32 0.0, %v387
  %v389 = vpop.f32.mrf.mxu0
  %v390 = vadd.f32 0.0, %v389
  %391 = vmatmul.bf16.gmra.mxu0 %v199
  %v392 = vpop.f32.mrf.mxu0
  %v393 = vadd.f32 0.0, %v392
  %v394 = vpop.f32.mrf.mxu0
  %v395 = vadd.f32 0.0, %v394
  %396 = vmatmul.bf16.gmra.mxu0 %v201
  %v397 = vpop.f32.mrf.mxu0
  %v398 = vadd.f32 0.0, %v397
  %v399 = vpop.f32.mrf.mxu0
  %v400 = vadd.f32 0.0, %v399
  %401 = vmatmul.bf16.gmra.mxu0 %v203
  %v402 = vpop.f32.mrf.mxu0
  %v403 = vadd.f32 0.0, %v402
  %v404 = vpop.f32.mrf.mxu0
  %v405 = vadd.f32 0.0, %v404
  %406 = vmatmul.bf16.gmra.mxu0 %v205
  %v407 = vpop.f32.mrf.mxu0
  %v408 = vadd.f32 0.0, %v407
  %v409 = vpop.f32.mrf.mxu0
  %v410 = vadd.f32 0.0, %v409
  %411 = vmatmul.bf16.gmra.mxu0 %v207
  %v412 = vpop.f32.mrf.mxu0
  %v413 = vadd.f32 0.0, %v412
  %v414 = vpop.f32.mrf.mxu0
  %v415 = vadd.f32 0.0, %v414
  %416 = vmatmul.bf16.gmra.mxu0 %v209
  %v417 = vpop.f32.mrf.mxu0
  %v418 = vadd.f32 0.0, %v417
  %v419 = vpop.f32.mrf.mxu0
  %v420 = vadd.f32 0.0, %v419
  %421 = vmatmul.bf16.gmra.mxu0 %v211
  %v422 = vpop.f32.mrf.mxu0
  %v423 = vadd.f32 0.0, %v422
  %v424 = vpop.f32.mrf.mxu0
  %v425 = vadd.f32 0.0, %v424
  %426 = vmatmul.bf16.gmra.mxu0 %v213
  %v427 = vpop.f32.mrf.mxu0
  %v428 = vadd.f32 0.0, %v427
  %v429 = vpop.f32.mrf.mxu0
  %v430 = vadd.f32 0.0, %v429
  %431 = vdwg.mxu0
  %432 = vmatpush.bf16.msra.mxu0 %v326
  %433 = vmatpush.bf16.msra.mxu0 %v325
  %434 = vmatpush.bf16.msra.mxu0 %v324
  %435 = vmatpush.bf16.msra.mxu0 %v323
  %436 = vmatpush.bf16.msra.mxu0 %v322
  %437 = vmatpush.bf16.msra.mxu0 %v321
  %438 = vmatpush.bf16.msra.mxu0 %v320
  %439 = vmatpush.bf16.msra.mxu0 %v319
  %440 = vmatmul.bf16.gmra.mxu0 %v184
  %v441 = vpop.f32.mrf.mxu0
  %v442 = vadd.f32 %v353, %v441
  %v443 = vpop.f32.mrf.mxu0
  %v444 = vadd.f32 %v355, %v443
  %445 = vmatmul.bf16.gmra.mxu0 %v186
  %v446 = vpop.f32.mrf.mxu0
  %v447 = vadd.f32 %v358, %v446
  %v448 = vpop.f32.mrf.mxu0
  %v449 = vadd.f32 %v360, %v448
  %450 = vmatmul.bf16.gmra.mxu0 %v188
  %v451 = vpop.f32.mrf.mxu0
  %v452 = vadd.f32 %v363, %v451
  %v453 = vpop.f32.mrf.mxu0
  %v454 = vadd.f32 %v365, %v453
  %455 = vmatmul.bf16.gmra.mxu0 %v190
  %v456 = vpop.f32.mrf.mxu0
  %v457 = vadd.f32 %v368, %v456
  %v458 = vpop.f32.mrf.mxu0
  %v459 = vadd.f32 %v370, %v458
  %460 = vmatmul.bf16.gmra.mxu0 %v192
  %v461 = vpop.f32.mrf.mxu0
  %v462 = vadd.f32 %v373, %v461
  %v463 = vpop.f32.mrf.mxu0
  %v464 = vadd.f32 %v375, %v463
  %465 = vmatmul.bf16.gmra.mxu0 %v194
  %v466 = vpop.f32.mrf.mxu0
  %v467 = vadd.f32 %v378, %v466
  %v468 = vpop.f32.mrf.mxu0
  %v469 = vadd.f32 %v380, %v468
  %470 = vmatmul.bf16.gmra.mxu0 %v196
  %v471 = vpop.f32.mrf.mxu0
  %v472 = vadd.f32 %v383, %v471
  %v473 = vpop.f32.mrf.mxu0
  %v474 = vadd.f32 %v385, %v473
  %475 = vmatmul.bf16.gmra.mxu0 %v198
  %v476 = vpop.f32.mrf.mxu0
  %v477 = vadd.f32 %v388, %v476
  %v478 = vpop.f32.mrf.mxu0
  %v479 = vadd.f32 %v390, %v478
  %480 = vmatmul.bf16.gmra.mxu0 %v200
  %v481 = vpop.f32.mrf.mxu0
  %v482 = vadd.f32 %v393, %v481
  %v483 = vpop.f32.mrf.mxu0
  %v484 = vadd.f32 %v395, %v483
  %485 = vmatmul.bf16.gmra.mxu0 %v202
  %v486 = vpop.f32.mrf.mxu0
  %v487 = vadd.f32 %v398, %v486
  %v488 = vpop.f32.mrf.mxu0
  %v489 = vadd.f32 %v400, %v488
  %490 = vmatmul.bf16.gmra.mxu0 %v204
  %v491 = vpop.f32.mrf.mxu0
  %v492 = vadd.f32 %v403, %v491
  %v493 = vpop.f32.mrf.mxu0
  %v494 = vadd.f32 %v405, %v493
  %495 = vmatmul.bf16.gmra.mxu0 %v206
  %v496 = vpop.f32.mrf.mxu0
  %v497 = vadd.f32 %v408, %v496
  %v498 = vpop.f32.mrf.mxu0
  %v499 = vadd.f32 %v410, %v498
  %500 = vmatmul.bf16.gmra.mxu0 %v208
  %v501 = vpop.f32.mrf.mxu0
  %v502 = vadd.f32 %v413, %v501
  %v503 = vpop.f32.mrf.mxu0
  %v504 = vadd.f32 %v415, %v503
  %505 = vmatmul.bf16.gmra.mxu0 %v210
  %v506 = vpop.f32.mrf.mxu0
  %v507 = vadd.f32 %v418, %v506
  %v508 = vpop.f32.mrf.mxu0
  %v509 = vadd.f32 %v420, %v508
  %510 = vmatmul.bf16.gmra.mxu0 %v212
  %v511 = vpop.f32.mrf.mxu0
  %v512 = vadd.f32 %v423, %v511
  %v513 = vpop.f32.mrf.mxu0
  %v514 = vadd.f32 %v425, %v513
  %515 = vmatmul.bf16.gmra.mxu0 %v214
  %v516 = vpop.f32.mrf.mxu0
  %v517 = vadd.f32 %v428, %v516
  %v518 = vpop.f32.mrf.mxu0
  %v519 = vadd.f32 %v430, %v518
  %520 = vdwg.mxu0
  %v521 = vpack.c.bf16 %v444, %v442
  %v522 = vpack.c.bf16 %v449, %v447
  %v523 = vpack.c.bf16 %v454, %v452
  %v524 = vpack.c.bf16 %v459, %v457
  %v525 = vpack.c.bf16 %v464, %v462
  %v526 = vpack.c.bf16 %v469, %v467
  %v527 = vpack.c.bf16 %v474, %v472
  %v528 = vpack.c.bf16 %v479, %v477
  %v529 = vpack.c.bf16 %v484, %v482
  %v530 = vpack.c.bf16 %v489, %v487
  %v531 = vpack.c.bf16 %v494, %v492
  %v532 = vpack.c.bf16 %v499, %v497
  %v533 = vpack.c.bf16 %v504, %v502
  %v534 = vpack.c.bf16 %v509, %v507
  %v535 = vpack.c.bf16 %v514, %v512
  %v536 = vpack.c.bf16 %v519, %v517
  %v537 = vld [vmem:[%s2] sm:$0xf]
  %v538 = vld [vmem:[%s2 + $0x4] sm:$0xf]
  %v539 = vld [vmem:[%s2 + $0x8] sm:$0xf]
  %v540 = vld [vmem:[%s2 + $0xc] sm:$0xf]
  %v541 = vld [vmem:[%s2 + $0x10] sm:$0xf]
  %v542 = vld [vmem:[%s2 + $0x14] sm:$0xf]
  %v543 = vld [vmem:[%s2 + $0x18] sm:$0xf]
  %v544 = vld [vmem:[%s2 + $0x1c] sm:$0xf]
  %v545 = vld [vmem:[%s2 + $0x20] sm:$0xf]
  %v546 = vld [vmem:[%s2 + $0x24] sm:$0xf]
  %v547 = vld [vmem:[%s2 + $0x28] sm:$0xf]
  %v548 = vld [vmem:[%s2 + $0x2c] sm:$0xf]
  %v549 = vld [vmem:[%s2 + $0x30] sm:$0xf]
  %v550 = vld [vmem:[%s2 + $0x34] sm:$0xf]
  %v551 = vld [vmem:[%s2 + $0x38] sm:$0xf]
  %v552 = vld [vmem:[%s2 + $0x3c] sm:$0xf]
  %v553 = vld [vmem:[%s3] sm:$0x1]
  %v555 = vperm.slane %v553, 0
  %v573 = vunpack.c.l.b16 %v537
  %v574 = vunpack.c.l.b16 %v538
  %v575 = vunpack.c.l.b16 %v539
  %v576 = vunpack.c.l.b16 %v540
  %v577 = vunpack.c.l.b16 %v541
  %v578 = vunpack.c.l.b16 %v542
  %v579 = vunpack.c.l.b16 %v543
  %v580 = vunpack.c.l.b16 %v544
  %v581 = vunpack.c.l.b16 %v545
  %v582 = vunpack.c.l.b16 %v546
  %v583 = vunpack.c.l.b16 %v547
  %v584 = vunpack.c.l.b16 %v548
  %v585 = vunpack.c.l.b16 %v549
  %v586 = vunpack.c.l.b16 %v550
  %v587 = vunpack.c.l.b16 %v551
  %v588 = vunpack.c.l.b16 %v552
  %v589 = vpack.c.b16 %v574, %v573
  %v590 = vpack.c.b16 %v576, %v575
  %v591 = vpack.c.b16 %v578, %v577
  %v592 = vpack.c.b16 %v580, %v579
  %v593 = vpack.c.b16 %v582, %v581
  %v594 = vpack.c.b16 %v584, %v583
  %v595 = vpack.c.b16 %v586, %v585
  %v596 = vpack.c.b16 %v588, %v587
  %605 = vmatpush.bf16.msra.mxu0 %v596
  %606 = vmatpush.bf16.msra.mxu0 %v595
  %607 = vmatpush.bf16.msra.mxu0 %v594
  %608 = vmatpush.bf16.msra.mxu0 %v593
  %609 = vmatpush.bf16.msra.mxu0 %v592
  %610 = vmatpush.bf16.msra.mxu0 %v591
  %611 = vmatpush.bf16.msra.mxu0 %v590
  %612 = vmatpush.bf16.msra.mxu0 %v589
  %613 = vmatmul.bf16.gmra.mxu0 %v521
  %v614 = vpop.f32.mrf.mxu0
  %v615 = vadd.f32 %v555, %v614
  %v616 = vpop.f32.mrf.mxu0
  %v617 = vadd.f32 %v555, %v616
  %618 = vmatmul.bf16.gmra.mxu0 %v522
  %v619 = vpop.f32.mrf.mxu0
  %v620 = vadd.f32 %v555, %v619
  %v621 = vpop.f32.mrf.mxu0
  %v622 = vadd.f32 %v555, %v621
  %623 = vmatmul.bf16.gmra.mxu0 %v523
  %v624 = vpop.f32.mrf.mxu0
  %v625 = vadd.f32 %v555, %v624
  %v626 = vpop.f32.mrf.mxu0
  %v627 = vadd.f32 %v555, %v626
  %628 = vmatmul.bf16.gmra.mxu0 %v524
  %v629 = vpop.f32.mrf.mxu0
  %v630 = vadd.f32 %v555, %v629
  %v631 = vpop.f32.mrf.mxu0
  %v632 = vadd.f32 %v555, %v631
  %633 = vmatmul.bf16.gmra.mxu0 %v525
  %v634 = vpop.f32.mrf.mxu0
  %v635 = vadd.f32 %v555, %v634
  %v636 = vpop.f32.mrf.mxu0
  %v637 = vadd.f32 %v555, %v636
  %638 = vmatmul.bf16.gmra.mxu0 %v526
  %v639 = vpop.f32.mrf.mxu0
  %v640 = vadd.f32 %v555, %v639
  %v641 = vpop.f32.mrf.mxu0
  %v642 = vadd.f32 %v555, %v641
  %643 = vmatmul.bf16.gmra.mxu0 %v527
  %v644 = vpop.f32.mrf.mxu0
  %v645 = vadd.f32 %v555, %v644
  %v646 = vpop.f32.mrf.mxu0
  %v647 = vadd.f32 %v555, %v646
  %648 = vmatmul.bf16.gmra.mxu0 %v528
  %v649 = vpop.f32.mrf.mxu0
  %v650 = vadd.f32 %v555, %v649
  %v651 = vpop.f32.mrf.mxu0
  %v652 = vadd.f32 %v555, %v651
  %653 = vmatmul.bf16.gmra.mxu0 %v529
  %v654 = vpop.f32.mrf.mxu0
  %v655 = vadd.f32 %v555, %v654
  %v656 = vpop.f32.mrf.mxu0
  %v657 = vadd.f32 %v555, %v656
  %658 = vmatmul.bf16.gmra.mxu0 %v530
  %v659 = vpop.f32.mrf.mxu0
  %v660 = vadd.f32 %v555, %v659
  %v661 = vpop.f32.mrf.mxu0
  %v662 = vadd.f32 %v555, %v661
  %663 = vmatmul.bf16.gmra.mxu0 %v531
  %v664 = vpop.f32.mrf.mxu0
  %v665 = vadd.f32 %v555, %v664
  %v666 = vpop.f32.mrf.mxu0
  %v667 = vadd.f32 %v555, %v666
  %668 = vmatmul.bf16.gmra.mxu0 %v532
  %v669 = vpop.f32.mrf.mxu0
  %v670 = vadd.f32 %v555, %v669
  %v671 = vpop.f32.mrf.mxu0
  %v672 = vadd.f32 %v555, %v671
  %673 = vmatmul.bf16.gmra.mxu0 %v533
  %v674 = vpop.f32.mrf.mxu0
  %v675 = vadd.f32 %v555, %v674
  %v676 = vpop.f32.mrf.mxu0
  %v677 = vadd.f32 %v555, %v676
  %678 = vmatmul.bf16.gmra.mxu0 %v534
  %v679 = vpop.f32.mrf.mxu0
  %v680 = vadd.f32 %v555, %v679
  %v681 = vpop.f32.mrf.mxu0
  %v682 = vadd.f32 %v555, %v681
  %683 = vmatmul.bf16.gmra.mxu0 %v535
  %v684 = vpop.f32.mrf.mxu0
  %v685 = vadd.f32 %v555, %v684
  %v686 = vpop.f32.mrf.mxu0
  %v687 = vadd.f32 %v555, %v686
  %688 = vmatmul.bf16.gmra.mxu0 %v536
  %v689 = vpop.f32.mrf.mxu0
  %v690 = vadd.f32 %v555, %v689
  %v691 = vpop.f32.mrf.mxu0
  %v692 = vadd.f32 %v555, %v691
  %693 = vdwg.mxu0
  %v694 = vmax.f32 %v615, 0.0
  %v695 = vmax.f32 %v617, 0.0
  %v696 = vmax.f32 %v620, 0.0
  %v697 = vmax.f32 %v622, 0.0
  %v698 = vmax.f32 %v625, 0.0
  %v699 = vmax.f32 %v627, 0.0
  %v700 = vmax.f32 %v630, 0.0
  %v701 = vmax.f32 %v632, 0.0
  %v702 = vmax.f32 %v635, 0.0
  %v703 = vmax.f32 %v637, 0.0
  %v704 = vmax.f32 %v640, 0.0
  %v705 = vmax.f32 %v642, 0.0
  %v706 = vmax.f32 %v645, 0.0
  %v707 = vmax.f32 %v647, 0.0
  %v708 = vmax.f32 %v650, 0.0
  %v709 = vmax.f32 %v652, 0.0
  %v710 = vmax.f32 %v655, 0.0
  %v711 = vmax.f32 %v657, 0.0
  %v712 = vmax.f32 %v660, 0.0
  %v713 = vmax.f32 %v662, 0.0
  %v714 = vmax.f32 %v665, 0.0
  %v715 = vmax.f32 %v667, 0.0
  %v716 = vmax.f32 %v670, 0.0
  %v717 = vmax.f32 %v672, 0.0
  %v718 = vmax.f32 %v675, 0.0
  %v719 = vmax.f32 %v677, 0.0
  %v720 = vmax.f32 %v680, 0.0
  %v721 = vmax.f32 %v682, 0.0
  %v722 = vmax.f32 %v685, 0.0
  %v723 = vmax.f32 %v687, 0.0
  %v724 = vmax.f32 %v690, 0.0
  %v725 = vmax.f32 %v692, 0.0
  %v726 = vpack.c.bf16 %v694, %v694
  %v727 = vpack.c.bf16 %v695, %v695
  %v728 = vpack.c.bf16 %v696, %v696
  %v729 = vpack.c.bf16 %v697, %v697
  %v730 = vpack.c.bf16 %v698, %v698
  %v731 = vpack.c.bf16 %v699, %v699
  %v732 = vpack.c.bf16 %v700, %v700
  %v733 = vpack.c.bf16 %v701, %v701
  %v734 = vpack.c.bf16 %v702, %v702
  %v735 = vpack.c.bf16 %v703, %v703
  %v736 = vpack.c.bf16 %v704, %v704
  %v737 = vpack.c.bf16 %v705, %v705
  %v738 = vpack.c.bf16 %v706, %v706
  %v739 = vpack.c.bf16 %v707, %v707
  %v740 = vpack.c.bf16 %v708, %v708
  %v741 = vpack.c.bf16 %v709, %v709
  %v742 = vpack.c.bf16 %v710, %v710
  %v743 = vpack.c.bf16 %v711, %v711
  %v744 = vpack.c.bf16 %v712, %v712
  %v745 = vpack.c.bf16 %v713, %v713
  %v746 = vpack.c.bf16 %v714, %v714
  %v747 = vpack.c.bf16 %v715, %v715
  %v748 = vpack.c.bf16 %v716, %v716
  %v749 = vpack.c.bf16 %v717, %v717
  %v750 = vpack.c.bf16 %v718, %v718
  %v751 = vpack.c.bf16 %v719, %v719
  %v752 = vpack.c.bf16 %v720, %v720
  %v753 = vpack.c.bf16 %v721, %v721
  %v754 = vpack.c.bf16 %v722, %v722
  %v755 = vpack.c.bf16 %v723, %v723
  %v756 = vpack.c.bf16 %v724, %v724
  %v757 = vpack.c.bf16 %v725, %v725
  %758 = vst [vmem:[#allocation2] sm:$0xf] %v726
  %759 = vst [vmem:[#allocation2 + $0x4] sm:$0xf] %v727
  %760 = vst [vmem:[#allocation2 + $0x8] sm:$0xf] %v728
  %761 = vst [vmem:[#allocation2 + $0xc] sm:$0xf] %v729
  %762 = vst [vmem:[#allocation2 + $0x10] sm:$0xf] %v730
  %763 = vst [vmem:[#allocation2 + $0x14] sm:$0xf] %v731
  %764 = vst [vmem:[#allocation2 + $0x18] sm:$0xf] %v732
  %765 = vst [vmem:[#allocation2 + $0x1c] sm:$0xf] %v733
  %766 = vst [vmem:[#allocation2 + $0x20] sm:$0xf] %v734
  %767 = vst [vmem:[#allocation2 + $0x24] sm:$0xf] %v735
  %768 = vst [vmem:[#allocation2 + $0x28] sm:$0xf] %v736
  %769 = vst [vmem:[#allocation2 + $0x2c] sm:$0xf] %v737
  %770 = vst [vmem:[#allocation2 + $0x30] sm:$0xf] %v738
  %771 = vst [vmem:[#allocation2 + $0x34] sm:$0xf] %v739
  %772 = vst [vmem:[#allocation2 + $0x38] sm:$0xf] %v740
  %773 = vst [vmem:[#allocation2 + $0x3c] sm:$0xf] %v741
  %774 = vst [vmem:[#allocation2 + $0x40] sm:$0xf] %v742
  %775 = vst [vmem:[#allocation2 + $0x44] sm:$0xf] %v743
  %776 = vst [vmem:[#allocation2 + $0x48] sm:$0xf] %v744
  %777 = vst [vmem:[#allocation2 + $0x4c] sm:$0xf] %v745
  %778 = vst [vmem:[#allocation2 + $0x50] sm:$0xf] %v746
  %779 = vst [vmem:[#allocation2 + $0x54] sm:$0xf] %v747
  %780 = vst [vmem:[#allocation2 + $0x58] sm:$0xf] %v748
  %781 = vst [vmem:[#allocation2 + $0x5c] sm:$0xf] %v749
  %782 = vst [vmem:[#allocation2 + $0x60] sm:$0xf] %v750
  %783 = vst [vmem:[#allocation2 + $0x64] sm:$0xf] %v751
  %784 = vst [vmem:[#allocation2 + $0x68] sm:$0xf] %v752
  %785 = vst [vmem:[#allocation2 + $0x6c] sm:$0xf] %v753
  %786 = vst [vmem:[#allocation2 + $0x70] sm:$0xf] %v754
  %787 = vst [vmem:[#allocation2 + $0x74] sm:$0xf] %v755
  %788 = vst [vmem:[#allocation2 + $0x78] sm:$0xf] %v756
  %789 = vst [vmem:[#allocation2 + $0x7c] sm:$0xf] %v757
  %v790 = vld [vmem:[%s0] sm:$0xff]
  %v791 = vld [vmem:[%s0 + $0x8] sm:$0xff]
  %v792 = vld [vmem:[%s0 + $0x10] sm:$0xff]
  %v793 = vld [vmem:[%s0 + $0x18] sm:$0xff]
  %v794 = vld [vmem:[%s0 + $0x20] sm:$0xff]
  %v795 = vld [vmem:[%s0 + $0x28] sm:$0xff]
  %v796 = vld [vmem:[%s0 + $0x30] sm:$0xff]
  %v797 = vld [vmem:[%s0 + $0x38] sm:$0xff]
  %v798 = vld [vmem:[%s0 + $0x40] sm:$0xff]
  %v799 = vld [vmem:[%s0 + $0x48] sm:$0xff]
  %v800 = vld [vmem:[%s0 + $0x50] sm:$0xff]
  %v801 = vld [vmem:[%s0 + $0x58] sm:$0xff]
  %v802 = vld [vmem:[%s0 + $0x60] sm:$0xff]
  %v803 = vld [vmem:[%s0 + $0x68] sm:$0xff]
  %v804 = vld [vmem:[%s0 + $0x70] sm:$0xff]
  %v805 = vld [vmem:[%s0 + $0x78] sm:$0xff]
  %v806 = vld [vmem:[%s0 + $0x80] sm:$0xff]
  %v807 = vld [vmem:[%s0 + $0x88] sm:$0xff]
  %v808 = vld [vmem:[%s0 + $0x90] sm:$0xff]
  %v809 = vld [vmem:[%s0 + $0x98] sm:$0xff]
  %v810 = vld [vmem:[%s0 + $0xa0] sm:$0xff]
  %v811 = vld [vmem:[%s0 + $0xa8] sm:$0xff]
  %v812 = vld [vmem:[%s0 + $0xb0] sm:$0xff]
  %v813 = vld [vmem:[%s0 + $0xb8] sm:$0xff]
  %v814 = vld [vmem:[%s0 + $0xc0] sm:$0xff]
  %v815 = vld [vmem:[%s0 + $0xc8] sm:$0xff]
  %v816 = vld [vmem:[%s0 + $0xd0] sm:$0xff]
  %v817 = vld [vmem:[%s0 + $0xd8] sm:$0xff]
  %v818 = vld [vmem:[%s0 + $0xe0] sm:$0xff]
  %v819 = vld [vmem:[%s0 + $0xe8] sm:$0xff]
  %v820 = vld [vmem:[%s0 + $0xf0] sm:$0xff]
  %v821 = vld [vmem:[%s0 + $0xf8] sm:$0xff]
  %v822 = vld [vmem:[#allocation2] sm:$0xf]
  %v823 = vld [vmem:[#allocation2 + $0x4] sm:$0xf]
  %v824 = vld [vmem:[#allocation2 + $0x8] sm:$0xf]
  %v825 = vld [vmem:[#allocation2 + $0xc] sm:$0xf]
  %v826 = vld [vmem:[#allocation2 + $0x10] sm:$0xf]
  %v827 = vld [vmem:[#allocation2 + $0x14] sm:$0xf]
  %v828 = vld [vmem:[#allocation2 + $0x18] sm:$0xf]
  %v829 = vld [vmem:[#allocation2 + $0x1c] sm:$0xf]
  %v830 = vld [vmem:[#allocation2 + $0x20] sm:$0xf]
  %v831 = vld [vmem:[#allocation2 + $0x24] sm:$0xf]
  %v832 = vld [vmem:[#allocation2 + $0x28] sm:$0xf]
  %v833 = vld [vmem:[#allocation2 + $0x2c] sm:$0xf]
  %v834 = vld [vmem:[#allocation2 + $0x30] sm:$0xf]
  %v835 = vld [vmem:[#allocation2 + $0x34] sm:$0xf]
  %v836 = vld [vmem:[#allocation2 + $0x38] sm:$0xf]
  %v837 = vld [vmem:[#allocation2 + $0x3c] sm:$0xf]
  %v838 = vld [vmem:[#allocation2 + $0x40] sm:$0xf]
  %v839 = vld [vmem:[#allocation2 + $0x44] sm:$0xf]
  %v840 = vld [vmem:[#allocation2 + $0x48] sm:$0xf]
  %v841 = vld [vmem:[#allocation2 + $0x4c] sm:$0xf]
  %v842 = vld [vmem:[#allocation2 + $0x50] sm:$0xf]
  %v843 = vld [vmem:[#allocation2 + $0x54] sm:$0xf]
  %v844 = vld [vmem:[#allocation2 + $0x58] sm:$0xf]
  %v845 = vld [vmem:[#allocation2 + $0x5c] sm:$0xf]
  %v846 = vld [vmem:[#allocation2 + $0x60] sm:$0xf]
  %v847 = vld [vmem:[#allocation2 + $0x64] sm:$0xf]
  %v848 = vld [vmem:[#allocation2 + $0x68] sm:$0xf]
  %v849 = vld [vmem:[#allocation2 + $0x6c] sm:$0xf]
  %v850 = vld [vmem:[#allocation2 + $0x70] sm:$0xf]
  %v851 = vld [vmem:[#allocation2 + $0x74] sm:$0xf]
  %v852 = vld [vmem:[#allocation2 + $0x78] sm:$0xf]
  %v853 = vld [vmem:[#allocation2 + $0x7c] sm:$0xf]
  %v886 = vunpack.c.l.b16 %v790
  %v887 = vunpack.c.h.b16 %v790
  %v888 = vunpack.c.l.b16 %v791
  %v889 = vunpack.c.h.b16 %v791
  %v890 = vunpack.c.l.b16 %v792
  %v891 = vunpack.c.h.b16 %v792
  %v892 = vunpack.c.l.b16 %v793
  %v893 = vunpack.c.h.b16 %v793
  %v894 = vunpack.c.l.b16 %v794
  %v895 = vunpack.c.h.b16 %v794
  %v896 = vunpack.c.l.b16 %v795
  %v897 = vunpack.c.h.b16 %v795
  %v898 = vunpack.c.l.b16 %v796
  %v899 = vunpack.c.h.b16 %v796
  %v900 = vunpack.c.l.b16 %v797
  %v901 = vunpack.c.h.b16 %v797
  %v902 = vunpack.c.l.b16 %v798
  %v903 = vunpack.c.h.b16 %v798
  %v904 = vunpack.c.l.b16 %v799
  %v905 = vunpack.c.h.b16 %v799
  %v906 = vunpack.c.l.b16 %v800
  %v907 = vunpack.c.h.b16 %v800
  %v908 = vunpack.c.l.b16 %v801
  %v909 = vunpack.c.h.b16 %v801
  %v910 = vunpack.c.l.b16 %v802
  %v911 = vunpack.c.h.b16 %v802
  %v912 = vunpack.c.l.b16 %v803
  %v913 = vunpack.c.h.b16 %v803
  %v914 = vunpack.c.l.b16 %v804
  %v915 = vunpack.c.h.b16 %v804
  %v916 = vunpack.c.l.b16 %v805
  %v917 = vunpack.c.h.b16 %v805
  %v918 = vunpack.c.l.b16 %v806
  %v919 = vunpack.c.h.b16 %v806
  %v920 = vunpack.c.l.b16 %v807
  %v921 = vunpack.c.h.b16 %v807
  %v922 = vunpack.c.l.b16 %v808
  %v923 = vunpack.c.h.b16 %v808
  %v924 = vunpack.c.l.b16 %v809
  %v925 = vunpack.c.h.b16 %v809
  %v926 = vunpack.c.l.b16 %v810
  %v927 = vunpack.c.h.b16 %v810
  %v928 = vunpack.c.l.b16 %v811
  %v929 = vunpack.c.h.b16 %v811
  %v930 = vunpack.c.l.b16 %v812
  %v931 = vunpack.c.h.b16 %v812
  %v932 = vunpack.c.l.b16 %v813
  %v933 = vunpack.c.h.b16 %v813
  %v934 = vunpack.c.l.b16 %v814
  %v935 = vunpack.c.h.b16 %v814
  %v936 = vunpack.c.l.b16 %v815
  %v937 = vunpack.c.h.b16 %v815
  %v938 = vunpack.c.l.b16 %v816
  %v939 = vunpack.c.h.b16 %v816
  %v940 = vunpack.c.l.b16 %v817
  %v941 = vunpack.c.h.b16 %v817
  %v942 = vunpack.c.l.b16 %v818
  %v943 = vunpack.c.h.b16 %v818
  %v944 = vunpack.c.l.b16 %v819
  %v945 = vunpack.c.h.b16 %v819
  %v946 = vunpack.c.l.b16 %v820
  %v947 = vunpack.c.h.b16 %v820
  %v948 = vunpack.c.l.b16 %v821
  %v949 = vunpack.c.h.b16 %v821
  %v950 = vpack.c.b16 %v888, %v886
  %v951 = vpack.c.b16 %v889, %v887
  %v952 = vpack.c.b16 %v892, %v890
  %v953 = vpack.c.b16 %v893, %v891
  %v954 = vpack.c.b16 %v896, %v894
  %v955 = vpack.c.b16 %v897, %v895
  %v956 = vpack.c.b16 %v900, %v898
  %v957 = vpack.c.b16 %v901, %v899
  %v958 = vpack.c.b16 %v904, %v902
  %v959 = vpack.c.b16 %v905, %v903
  %v960 = vpack.c.b16 %v908, %v906
  %v961 = vpack.c.b16 %v909, %v907
  %v962 = vpack.c.b16 %v912, %v910
  %v963 = vpack.c.b16 %v913, %v911
  %v964 = vpack.c.b16 %v916, %v914
  %v965 = vpack.c.b16 %v917, %v915
  %v966 = vpack.c.b16 %v920, %v918
  %v967 = vpack.c.b16 %v921, %v919
  %v968 = vpack.c.b16 %v924, %v922
  %v969 = vpack.c.b16 %v925, %v923
  %v970 = vpack.c.b16 %v928, %v926
  %v971 = vpack.c.b16 %v929, %v927
  %v972 = vpack.c.b16 %v932, %v930
  %v973 = vpack.c.b16 %v933, %v931
  %v974 = vpack.c.b16 %v936, %v934
  %v975 = vpack.c.b16 %v937, %v935
  %v976 = vpack.c.b16 %v940, %v938
  %v977 = vpack.c.b16 %v941, %v939
  %v978 = vpack.c.b16 %v944, %v942
  %v979 = vpack.c.b16 %v945, %v943
  %v980 = vpack.c.b16 %v948, %v946
  %v981 = vpack.c.b16 %v949, %v947
  %v1046 = vunpack.c.l.b16 %v822
  %v1047 = vunpack.c.l.b16 %v823
  %v1048 = vunpack.c.l.b16 %v824
  %v1049 = vunpack.c.l.b16 %v825
  %v1050 = vunpack.c.l.b16 %v826
  %v1051 = vunpack.c.l.b16 %v827
  %v1052 = vunpack.c.l.b16 %v828
  %v1053 = vunpack.c.l.b16 %v829
  %v1054 = vunpack.c.l.b16 %v830
  %v1055 = vunpack.c.l.b16 %v831
  %v1056 = vunpack.c.l.b16 %v832
  %v1057 = vunpack.c.l.b16 %v833
  %v1058 = vunpack.c.l.b16 %v834
  %v1059 = vunpack.c.l.b16 %v835
  %v1060 = vunpack.c.l.b16 %v836
  %v1061 = vunpack.c.l.b16 %v837
  %v1062 = vunpack.c.l.b16 %v838
  %v1063 = vunpack.c.l.b16 %v839
  %v1064 = vunpack.c.l.b16 %v840
  %v1065 = vunpack.c.l.b16 %v841
  %v1066 = vunpack.c.l.b16 %v842
  %v1067 = vunpack.c.l.b16 %v843
  %v1068 = vunpack.c.l.b16 %v844
  %v1069 = vunpack.c.l.b16 %v845
  %v1070 = vunpack.c.l.b16 %v846
  %v1071 = vunpack.c.l.b16 %v847
  %v1072 = vunpack.c.l.b16 %v848
  %v1073 = vunpack.c.l.b16 %v849
  %v1074 = vunpack.c.l.b16 %v850
  %v1075 = vunpack.c.l.b16 %v851
  %v1076 = vunpack.c.l.b16 %v852
  %v1077 = vunpack.c.l.b16 %v853
  %v1078 = vpack.c.b16 %v1047, %v1046
  %v1079 = vpack.c.b16 %v1049, %v1048
  %v1080 = vpack.c.b16 %v1051, %v1050
  %v1081 = vpack.c.b16 %v1053, %v1052
  %v1082 = vpack.c.b16 %v1055, %v1054
  %v1083 = vpack.c.b16 %v1057, %v1056
  %v1084 = vpack.c.b16 %v1059, %v1058
  %v1085 = vpack.c.b16 %v1061, %v1060
  %v1086 = vpack.c.b16 %v1063, %v1062
  %v1087 = vpack.c.b16 %v1065, %v1064
  %v1088 = vpack.c.b16 %v1067, %v1066
  %v1089 = vpack.c.b16 %v1069, %v1068
  %v1090 = vpack.c.b16 %v1071, %v1070
  %v1091 = vpack.c.b16 %v1073, %v1072
  %v1092 = vpack.c.b16 %v1075, %v1074
  %v1093 = vpack.c.b16 %v1077, %v1076
  %1110 = vmatpush.bf16.msra.mxu0 %v1085
  %1111 = vmatpush.bf16.msra.mxu0 %v1084
  %1112 = vmatpush.bf16.msra.mxu0 %v1083
  %1113 = vmatpush.bf16.msra.mxu0 %v1082
  %1114 = vmatpush.bf16.msra.mxu0 %v1081
  %1115 = vmatpush.bf16.msra.mxu0 %v1080
  %1116 = vmatpush.bf16.msra.mxu0 %v1079
  %1117 = vmatpush.bf16.msra.mxu0 %v1078
  %1118 = vmatmul.bf16.gmra.mxu0 %v950
  %v1119 = vpop.f32.mrf.mxu0
  %v1120 = vadd.f32 0.0, %v1119
  %v1121 = vpop.f32.mrf.mxu0
  %v1122 = vadd.f32 0.0, %v1121
  %1123 = vmatmul.bf16.gmra.mxu0 %v952
  %v1124 = vpop.f32.mrf.mxu0
  %v1125 = vadd.f32 0.0, %v1124
  %v1126 = vpop.f32.mrf.mxu0
  %v1127 = vadd.f32 0.0, %v1126
  %1128 = vmatmul.bf16.gmra.mxu0 %v954
  %v1129 = vpop.f32.mrf.mxu0
  %v1130 = vadd.f32 0.0, %v1129
  %v1131 = vpop.f32.mrf.mxu0
  %v1132 = vadd.f32 0.0, %v1131
  %1133 = vmatmul.bf16.gmra.mxu0 %v956
  %v1134 = vpop.f32.mrf.mxu0
  %v1135 = vadd.f32 0.0, %v1134
  %v1136 = vpop.f32.mrf.mxu0
  %v1137 = vadd.f32 0.0, %v1136
  %1138 = vmatmul.bf16.gmra.mxu0 %v958
  %v1139 = vpop.f32.mrf.mxu0
  %v1140 = vadd.f32 0.0, %v1139
  %v1141 = vpop.f32.mrf.mxu0
  %v1142 = vadd.f32 0.0, %v1141
  %1143 = vmatmul.bf16.gmra.mxu0 %v960
  %v1144 = vpop.f32.mrf.mxu0
  %v1145 = vadd.f32 0.0, %v1144
  %v1146 = vpop.f32.mrf.mxu0
  %v1147 = vadd.f32 0.0, %v1146
  %1148 = vmatmul.bf16.gmra.mxu0 %v962
  %v1149 = vpop.f32.mrf.mxu0
  %v1150 = vadd.f32 0.0, %v1149
  %v1151 = vpop.f32.mrf.mxu0
  %v1152 = vadd.f32 0.0, %v1151
  %1153 = vmatmul.bf16.gmra.mxu0 %v964
  %v1154 = vpop.f32.mrf.mxu0
  %v1155 = vadd.f32 0.0, %v1154
  %v1156 = vpop.f32.mrf.mxu0
  %v1157 = vadd.f32 0.0, %v1156
  %1158 = vmatmul.bf16.gmra.mxu0 %v966
  %v1159 = vpop.f32.mrf.mxu0
  %v1160 = vadd.f32 0.0, %v1159
  %v1161 = vpop.f32.mrf.mxu0
  %v1162 = vadd.f32 0.0, %v1161
  %1163 = vmatmul.bf16.gmra.mxu0 %v968
  %v1164 = vpop.f32.mrf.mxu0
  %v1165 = vadd.f32 0.0, %v1164
  %v1166 = vpop.f32.mrf.mxu0
  %v1167 = vadd.f32 0.0, %v1166
  %1168 = vmatmul.bf16.gmra.mxu0 %v970
  %v1169 = vpop.f32.mrf.mxu0
  %v1170 = vadd.f32 0.0, %v1169
  %v1171 = vpop.f32.mrf.mxu0
  %v1172 = vadd.f32 0.0, %v1171
  %1173 = vmatmul.bf16.gmra.mxu0 %v972
  %v1174 = vpop.f32.mrf.mxu0
  %v1175 = vadd.f32 0.0, %v1174
  %v1176 = vpop.f32.mrf.mxu0
  %v1177 = vadd.f32 0.0, %v1176
  %1178 = vmatmul.bf16.gmra.mxu0 %v974
  %v1179 = vpop.f32.mrf.mxu0
  %v1180 = vadd.f32 0.0, %v1179
  %v1181 = vpop.f32.mrf.mxu0
  %v1182 = vadd.f32 0.0, %v1181
  %1183 = vmatmul.bf16.gmra.mxu0 %v976
  %v1184 = vpop.f32.mrf.mxu0
  %v1185 = vadd.f32 0.0, %v1184
  %v1186 = vpop.f32.mrf.mxu0
  %v1187 = vadd.f32 0.0, %v1186
  %1188 = vmatmul.bf16.gmra.mxu0 %v978
  %v1189 = vpop.f32.mrf.mxu0
  %v1190 = vadd.f32 0.0, %v1189
  %v1191 = vpop.f32.mrf.mxu0
  %v1192 = vadd.f32 0.0, %v1191
  %1193 = vmatmul.bf16.gmra.mxu0 %v980
  %v1194 = vpop.f32.mrf.mxu0
  %v1195 = vadd.f32 0.0, %v1194
  %v1196 = vpop.f32.mrf.mxu0
  %v1197 = vadd.f32 0.0, %v1196
  %1198 = vdwg.mxu0
  %1199 = vmatpush.bf16.msra.mxu0 %v1093
  %1200 = vmatpush.bf16.msra.mxu0 %v1092
  %1201 = vmatpush.bf16.msra.mxu0 %v1091
  %1202 = vmatpush.bf16.msra.mxu0 %v1090
  %1203 = vmatpush.bf16.msra.mxu0 %v1089
  %1204 = vmatpush.bf16.msra.mxu0 %v1088
  %1205 = vmatpush.bf16.msra.mxu0 %v1087
  %1206 = vmatpush.bf16.msra.mxu0 %v1086
  %1207 = vmatmul.bf16.gmra.mxu0 %v951
  %v1208 = vpop.f32.mrf.mxu0
  %v1209 = vadd.f32 %v1120, %v1208
  %v1210 = vpop.f32.mrf.mxu0
  %v1211 = vadd.f32 %v1122, %v1210
  %1212 = vmatmul.bf16.gmra.mxu0 %v953
  %v1213 = vpop.f32.mrf.mxu0
  %v1214 = vadd.f32 %v1125, %v1213
  %v1215 = vpop.f32.mrf.mxu0
  %v1216 = vadd.f32 %v1127, %v1215
  %1217 = vmatmul.bf16.gmra.mxu0 %v955
  %v1218 = vpop.f32.mrf.mxu0
  %v1219 = vadd.f32 %v1130, %v1218
  %v1220 = vpop.f32.mrf.mxu0
  %v1221 = vadd.f32 %v1132, %v1220
  %1222 = vmatmul.bf16.gmra.mxu0 %v957
  %v1223 = vpop.f32.mrf.mxu0
  %v1224 = vadd.f32 %v1135, %v1223
  %v1225 = vpop.f32.mrf.mxu0
  %v1226 = vadd.f32 %v1137, %v1225
  %1227 = vmatmul.bf16.gmra.mxu0 %v959
  %v1228 = vpop.f32.mrf.mxu0
  %v1229 = vadd.f32 %v1140, %v1228
  %v1230 = vpop.f32.mrf.mxu0
  %v1231 = vadd.f32 %v1142, %v1230
  %1232 = vmatmul.bf16.gmra.mxu0 %v961
  %v1233 = vpop.f32.mrf.mxu0
  %v1234 = vadd.f32 %v1145, %v1233
  %v1235 = vpop.f32.mrf.mxu0
  %v1236 = vadd.f32 %v1147, %v1235
  %1237 = vmatmul.bf16.gmra.mxu0 %v963
  %v1238 = vpop.f32.mrf.mxu0
  %v1239 = vadd.f32 %v1150, %v1238
  %v1240 = vpop.f32.mrf.mxu0
  %v1241 = vadd.f32 %v1152, %v1240
  %1242 = vmatmul.bf16.gmra.mxu0 %v965
  %v1243 = vpop.f32.mrf.mxu0
  %v1244 = vadd.f32 %v1155, %v1243
  %v1245 = vpop.f32.mrf.mxu0
  %v1246 = vadd.f32 %v1157, %v1245
  %1247 = vmatmul.bf16.gmra.mxu0 %v967
  %v1248 = vpop.f32.mrf.mxu0
  %v1249 = vadd.f32 %v1160, %v1248
  %v1250 = vpop.f32.mrf.mxu0
  %v1251 = vadd.f32 %v1162, %v1250
  %1252 = vmatmul.bf16.gmra.mxu0 %v969
  %v1253 = vpop.f32.mrf.mxu0
  %v1254 = vadd.f32 %v1165, %v1253
  %v1255 = vpop.f32.mrf.mxu0
  %v1256 = vadd.f32 %v1167, %v1255
  %1257 = vmatmul.bf16.gmra.mxu0 %v971
  %v1258 = vpop.f32.mrf.mxu0
  %v1259 = vadd.f32 %v1170, %v1258
  %v1260 = vpop.f32.mrf.mxu0
  %v1261 = vadd.f32 %v1172, %v1260
  %1262 = vmatmul.bf16.gmra.mxu0 %v973
  %v1263 = vpop.f32.mrf.mxu0
  %v1264 = vadd.f32 %v1175, %v1263
  %v1265 = vpop.f32.mrf.mxu0
  %v1266 = vadd.f32 %v1177, %v1265
  %1267 = vmatmul.bf16.gmra.mxu0 %v975
  %v1268 = vpop.f32.mrf.mxu0
  %v1269 = vadd.f32 %v1180, %v1268
  %v1270 = vpop.f32.mrf.mxu0
  %v1271 = vadd.f32 %v1182, %v1270
  %1272 = vmatmul.bf16.gmra.mxu0 %v977
  %v1273 = vpop.f32.mrf.mxu0
  %v1274 = vadd.f32 %v1185, %v1273
  %v1275 = vpop.f32.mrf.mxu0
  %v1276 = vadd.f32 %v1187, %v1275
  %1277 = vmatmul.bf16.gmra.mxu0 %v979
  %v1278 = vpop.f32.mrf.mxu0
  %v1279 = vadd.f32 %v1190, %v1278
  %v1280 = vpop.f32.mrf.mxu0
  %v1281 = vadd.f32 %v1192, %v1280
  %1282 = vmatmul.bf16.gmra.mxu0 %v981
  %v1283 = vpop.f32.mrf.mxu0
  %v1284 = vadd.f32 %v1195, %v1283
  %v1285 = vpop.f32.mrf.mxu0
  %v1286 = vadd.f32 %v1197, %v1285
  %1287 = vdwg.mxu0
  %v1288 = vpack.c.bf16 %v1211, %v1209
  %v1289 = vpack.c.bf16 %v1216, %v1214
  %v1290 = vpack.c.bf16 %v1221, %v1219
  %v1291 = vpack.c.bf16 %v1226, %v1224
  %v1292 = vpack.c.bf16 %v1231, %v1229
  %v1293 = vpack.c.bf16 %v1236, %v1234
  %v1294 = vpack.c.bf16 %v1241, %v1239
  %v1295 = vpack.c.bf16 %v1246, %v1244
  %v1296 = vpack.c.bf16 %v1251, %v1249
  %v1297 = vpack.c.bf16 %v1256, %v1254
  %v1298 = vpack.c.bf16 %v1261, %v1259
  %v1299 = vpack.c.bf16 %v1266, %v1264
  %v1300 = vpack.c.bf16 %v1271, %v1269
  %v1301 = vpack.c.bf16 %v1276, %v1274
  %v1302 = vpack.c.bf16 %v1281, %v1279
  %v1303 = vpack.c.bf16 %v1286, %v1284
  %v1304 = vld [vmem:[%s4] sm:$0xf]
  %v1305 = vld [vmem:[%s4 + $0x4] sm:$0xf]
  %v1306 = vld [vmem:[%s4 + $0x8] sm:$0xf]
  %v1307 = vld [vmem:[%s4 + $0xc] sm:$0xf]
  %v1308 = vld [vmem:[%s4 + $0x10] sm:$0xf]
  %v1309 = vld [vmem:[%s4 + $0x14] sm:$0xf]
  %v1310 = vld [vmem:[%s4 + $0x18] sm:$0xf]
  %v1311 = vld [vmem:[%s4 + $0x1c] sm:$0xf]
  %v1312 = vld [vmem:[%s4 + $0x20] sm:$0xf]
  %v1313 = vld [vmem:[%s4 + $0x24] sm:$0xf]
  %v1314 = vld [vmem:[%s4 + $0x28] sm:$0xf]
  %v1315 = vld [vmem:[%s4 + $0x2c] sm:$0xf]
  %v1316 = vld [vmem:[%s4 + $0x30] sm:$0xf]
  %v1317 = vld [vmem:[%s4 + $0x34] sm:$0xf]
  %v1318 = vld [vmem:[%s4 + $0x38] sm:$0xf]
  %v1319 = vld [vmem:[%s4 + $0x3c] sm:$0xf]
  %v1320 = vld [vmem:[%s5] sm:$0x1]
  %v1322 = vperm.slane %v1320, 0
  %v1340 = vunpack.c.l.b16 %v1304
  %v1341 = vunpack.c.l.b16 %v1305
  %v1342 = vunpack.c.l.b16 %v1306
  %v1343 = vunpack.c.l.b16 %v1307
  %v1344 = vunpack.c.l.b16 %v1308
  %v1345 = vunpack.c.l.b16 %v1309
  %v1346 = vunpack.c.l.b16 %v1310
  %v1347 = vunpack.c.l.b16 %v1311
  %v1348 = vunpack.c.l.b16 %v1312
  %v1349 = vunpack.c.l.b16 %v1313
  %v1350 = vunpack.c.l.b16 %v1314
  %v1351 = vunpack.c.l.b16 %v1315
  %v1352 = vunpack.c.l.b16 %v1316
  %v1353 = vunpack.c.l.b16 %v1317
  %v1354 = vunpack.c.l.b16 %v1318
  %v1355 = vunpack.c.l.b16 %v1319
  %v1356 = vpack.c.b16 %v1341, %v1340
  %v1357 = vpack.c.b16 %v1343, %v1342
  %v1358 = vpack.c.b16 %v1345, %v1344
  %v1359 = vpack.c.b16 %v1347, %v1346
  %v1360 = vpack.c.b16 %v1349, %v1348
  %v1361 = vpack.c.b16 %v1351, %v1350
  %v1362 = vpack.c.b16 %v1353, %v1352
  %v1363 = vpack.c.b16 %v1355, %v1354
  %1372 = vmatpush.bf16.msra.mxu0 %v1363
  %1373 = vmatpush.bf16.msra.mxu0 %v1362
  %1374 = vmatpush.bf16.msra.mxu0 %v1361
  %1375 = vmatpush.bf16.msra.mxu0 %v1360
  %1376 = vmatpush.bf16.msra.mxu0 %v1359
  %1377 = vmatpush.bf16.msra.mxu0 %v1358
  %1378 = vmatpush.bf16.msra.mxu0 %v1357
  %1379 = vmatpush.bf16.msra.mxu0 %v1356
  %1380 = vmatmul.bf16.gmra.mxu0 %v1288
  %v1381 = vpop.f32.mrf.mxu0
  %v1382 = vadd.f32 %v1322, %v1381
  %v1383 = vpop.f32.mrf.mxu0
  %v1384 = vadd.f32 %v1322, %v1383
  %1385 = vmatmul.bf16.gmra.mxu0 %v1289
  %v1386 = vpop.f32.mrf.mxu0
  %v1387 = vadd.f32 %v1322, %v1386
  %v1388 = vpop.f32.mrf.mxu0
  %v1389 = vadd.f32 %v1322, %v1388
  %1390 = vmatmul.bf16.gmra.mxu0 %v1290
  %v1391 = vpop.f32.mrf.mxu0
  %v1392 = vadd.f32 %v1322, %v1391
  %v1393 = vpop.f32.mrf.mxu0
  %v1394 = vadd.f32 %v1322, %v1393
  %1395 = vmatmul.bf16.gmra.mxu0 %v1291
  %v1396 = vpop.f32.mrf.mxu0
  %v1397 = vadd.f32 %v1322, %v1396
  %v1398 = vpop.f32.mrf.mxu0
  %v1399 = vadd.f32 %v1322, %v1398
  %1400 = vmatmul.bf16.gmra.mxu0 %v1292
  %v1401 = vpop.f32.mrf.mxu0
  %v1402 = vadd.f32 %v1322, %v1401
  %v1403 = vpop.f32.mrf.mxu0
  %v1404 = vadd.f32 %v1322, %v1403
  %1405 = vmatmul.bf16.gmra.mxu0 %v1293
  %v1406 = vpop.f32.mrf.mxu0
  %v1407 = vadd.f32 %v1322, %v1406
  %v1408 = vpop.f32.mrf.mxu0
  %v1409 = vadd.f32 %v1322, %v1408
  %1410 = vmatmul.bf16.gmra.mxu0 %v1294
  %v1411 = vpop.f32.mrf.mxu0
  %v1412 = vadd.f32 %v1322, %v1411
  %v1413 = vpop.f32.mrf.mxu0
  %v1414 = vadd.f32 %v1322, %v1413
  %1415 = vmatmul.bf16.gmra.mxu0 %v1295
  %v1416 = vpop.f32.mrf.mxu0
  %v1417 = vadd.f32 %v1322, %v1416
  %v1418 = vpop.f32.mrf.mxu0
  %v1419 = vadd.f32 %v1322, %v1418
  %1420 = vmatmul.bf16.gmra.mxu0 %v1296
  %v1421 = vpop.f32.mrf.mxu0
  %v1422 = vadd.f32 %v1322, %v1421
  %v1423 = vpop.f32.mrf.mxu0
  %v1424 = vadd.f32 %v1322, %v1423
  %1425 = vmatmul.bf16.gmra.mxu0 %v1297
  %v1426 = vpop.f32.mrf.mxu0
  %v1427 = vadd.f32 %v1322, %v1426
  %v1428 = vpop.f32.mrf.mxu0
  %v1429 = vadd.f32 %v1322, %v1428
  %1430 = vmatmul.bf16.gmra.mxu0 %v1298
  %v1431 = vpop.f32.mrf.mxu0
  %v1432 = vadd.f32 %v1322, %v1431
  %v1433 = vpop.f32.mrf.mxu0
  %v1434 = vadd.f32 %v1322, %v1433
  %1435 = vmatmul.bf16.gmra.mxu0 %v1299
  %v1436 = vpop.f32.mrf.mxu0
  %v1437 = vadd.f32 %v1322, %v1436
  %v1438 = vpop.f32.mrf.mxu0
  %v1439 = vadd.f32 %v1322, %v1438
  %1440 = vmatmul.bf16.gmra.mxu0 %v1300
  %v1441 = vpop.f32.mrf.mxu0
  %v1442 = vadd.f32 %v1322, %v1441
  %v1443 = vpop.f32.mrf.mxu0
  %v1444 = vadd.f32 %v1322, %v1443
  %1445 = vmatmul.bf16.gmra.mxu0 %v1301
  %v1446 = vpop.f32.mrf.mxu0
  %v1447 = vadd.f32 %v1322, %v1446
  %v1448 = vpop.f32.mrf.mxu0
  %v1449 = vadd.f32 %v1322, %v1448
  %1450 = vmatmul.bf16.gmra.mxu0 %v1302
  %v1451 = vpop.f32.mrf.mxu0
  %v1452 = vadd.f32 %v1322, %v1451
  %v1453 = vpop.f32.mrf.mxu0
  %v1454 = vadd.f32 %v1322, %v1453
  %1455 = vmatmul.bf16.gmra.mxu0 %v1303
  %v1456 = vpop.f32.mrf.mxu0
  %v1457 = vadd.f32 %v1322, %v1456
  %v1458 = vpop.f32.mrf.mxu0
  %v1459 = vadd.f32 %v1322, %v1458
  %1460 = vdwg.mxu0
  %1461 = vst [vmem:[%s6] sm:$0xff] %v1382
  %1462 = vst [vmem:[%s6 + $0x8] sm:$0xff] %v1384
  %1463 = vst [vmem:[%s6 + $0x10] sm:$0xff] %v1387
  %1464 = vst [vmem:[%s6 + $0x18] sm:$0xff] %v1389
  %1465 = vst [vmem:[%s6 + $0x20] sm:$0xff] %v1392
  %1466 = vst [vmem:[%s6 + $0x28] sm:$0xff] %v1394
  %1467 = vst [vmem:[%s6 + $0x30] sm:$0xff] %v1397
  %1468 = vst [vmem:[%s6 + $0x38] sm:$0xff] %v1399
  %1469 = vst [vmem:[%s6 + $0x40] sm:$0xff] %v1402
  %1470 = vst [vmem:[%s6 + $0x48] sm:$0xff] %v1404
  %1471 = vst [vmem:[%s6 + $0x50] sm:$0xff] %v1407
  %1472 = vst [vmem:[%s6 + $0x58] sm:$0xff] %v1409
  %1473 = vst [vmem:[%s6 + $0x60] sm:$0xff] %v1412
  %1474 = vst [vmem:[%s6 + $0x68] sm:$0xff] %v1414
  %1475 = vst [vmem:[%s6 + $0x70] sm:$0xff] %v1417
  %1476 = vst [vmem:[%s6 + $0x78] sm:$0xff] %v1419
  %1477 = vst [vmem:[%s6 + $0x80] sm:$0xff] %v1422
  %1478 = vst [vmem:[%s6 + $0x88] sm:$0xff] %v1424
  %1479 = vst [vmem:[%s6 + $0x90] sm:$0xff] %v1427
  %1480 = vst [vmem:[%s6 + $0x98] sm:$0xff] %v1429
  %1481 = vst [vmem:[%s6 + $0xa0] sm:$0xff] %v1432
  %1482 = vst [vmem:[%s6 + $0xa8] sm:$0xff] %v1434
  %1483 = vst [vmem:[%s6 + $0xb0] sm:$0xff] %v1437
  %1484 = vst [vmem:[%s6 + $0xb8] sm:$0xff] %v1439
  %1485 = vst [vmem:[%s6 + $0xc0] sm:$0xff] %v1442
  %1486 = vst [vmem:[%s6 + $0xc8] sm:$0xff] %v1444
  %1487 = vst [vmem:[%s6 + $0xd0] sm:$0xff] %v1447
  %1488 = vst [vmem:[%s6 + $0xd8] sm:$0xff] %v1449
  %1489 = vst [vmem:[%s6 + $0xe0] sm:$0xff] %v1452
  %1490 = vst [vmem:[%s6 + $0xe8] sm:$0xff] %v1454
  %1491 = vst [vmem:[%s6 + $0xf0] sm:$0xff] %v1457
  %1492 = vst [vmem:[%s6 + $0xf8] sm:$0xff] %v1459
  // Predicated region
  $region26: #{gcn_encoder.1} parent=0 // pred_check
    _
  $region27: #{gcn_encoder.1} parent=0 // pred_check_branch
    %1494 = sbr.rel (0) target = $region29
  $region28: #{gcn_encoder.1} parent=0 // pred_region
    _
  $region29: #{gcn_encoder.1} parent=0 // pred_fallthru
    _
  // Predicated region
  $region30: #{gcn_encoder.1} parent=0 // pred_check
    _
  $region31: #{gcn_encoder.1} parent=0 // pred_check_branch
    %1496 = sbr.rel (0) target = $region33
  $region32: #{gcn_encoder.1} parent=0 // pred_region
    _
  $region33: #{gcn_encoder.1} parent=0 // pred_fallthru
    _

</llo_original>
